<compile_context>
chip_gen: v5e
topology: v5e:2x2
jax: 0.10.0
libtpu: 0.0.40
codegen_flags: <defaults>
</compile_context>

<pallas_src>
import jax
import jax.numpy as jnp
from jax import lax
from jax.experimental import pallas as pl
from jax.experimental.pallas import tpu as pltpu

# Model hyperparameters (match the PyTorch defaults)
INPUT_SIZE = 1
HIDDEN_SIZE = 128
LATENT_SIZE = 16
OUTPUT_SIZE = 1

# Layer topology: encoder (1->128, 128->16), decoder (16->128, 128->1)
LAYER_DIMS = [
    (INPUT_SIZE, HIDDEN_SIZE),
    (HIDDEN_SIZE, LATENT_SIZE),
    (LATENT_SIZE, HIDDEN_SIZE),
    (HIDDEN_SIZE, OUTPUT_SIZE),
]


def make_lstm_ae_kernel(T, B):
    """Builds the fused 4-layer LSTM autoencoder kernel for fixed T, padded B."""
    H = HIDDEN_SIZE          # effective (padded) hidden width for layers 1-3
    H4 = 4 * H

    def gates(z, h):
        i = jax.nn.sigmoid(z[:, 0 * h:1 * h])
        f = jax.nn.sigmoid(z[:, 1 * h:2 * h])
        g = jnp.tanh(z[:, 2 * h:3 * h])
        o = jax.nn.sigmoid(z[:, 3 * h:4 * h])
        return i, f, g, o

    def kernel(x_ref,
               wih1, whh1, b1,
               wih2, whh2, b2,
               wih3, whh3, b3,
               wih4, whh4, b4,
               y_ref,
               a1, a2, z_ref):
        # ---- generic 128-wide recurrence; z_ih (+bias) already in z_ref ----
        def recurrence_128(whh_ref, out_ref):
            whh = whh_ref[...]                              # (128, 512)

            def step(t, carry):
                h, c = carry
                r = pl.multiple_of(t * B, B)
                z = z_ref[pl.ds(r, B), :] + jnp.dot(
                    h, whh, preferred_element_type=jnp.float32)
                i, f, g, o = gates(z, H)
                c_new = f * c + i * g
                h_new = o * jnp.tanh(c_new)
                out_ref[pl.ds(r, B), :] = h_new
                return h_new, c_new

            h0 = jnp.zeros((B, H), jnp.float32)
            c0 = jnp.zeros((B, H), jnp.float32)
            lax.fori_loop(0, T, step, (h0, c0))

        # ---- layer 1: 1 -> 128.  Din=1 i2h is a VPU broadcast, no MXU. ----
        z_ref[...] = x_ref[...] * wih1[...] + b1[...]        # (T*B,1)*(1,512)
        recurrence_128(whh1, a1)

        # ---- layer 2: 128 -> 16 (padded to 128).  i2h hoisted: one matmul ----
        z_ref[...] = jnp.dot(a1[...], wih2[...],
                             preferred_element_type=jnp.float32) + b2[...]
        recurrence_128(whh2, a2)

        # ---- layer 3: 16(pad 128) -> 128.  Reuse a1 as the output scratch ----
        z_ref[...] = jnp.dot(a2[...], wih3[...],
                             preferred_element_type=jnp.float32) + b3[...]
        recurrence_128(whh3, a1)

        # ---- layer 4: 128 -> 1.  i2h hoisted (K=128 matmul, done once);
        #      h2h is K=1 so the recurrence is pure VPU/EUP, no MXU. ----
        z4 = jnp.dot(a1[...], wih4[...],
                     preferred_element_type=jnp.float32) + b4[...]   # (T*B, 4)
        z_ref[:, 0:4] = z4
        whh4v = whh4[...]                                    # (1, 4)

        def step4(t, carry):
            h, c = carry                                     # (B, 1)
            r = pl.multiple_of(t * B, B)
            z = z_ref[pl.ds(r, B), 0:4] + h * whh4v          # (B, 4)
            i, f, g, o = gates(z, 1)
            c_new = f * c + i * g
            h_new = o * jnp.tanh(c_new)
            y_ref[pl.ds(r, B), :] = h_new
            return h_new, c_new

        lax.fori_loop(0, T, step4,
                      (jnp.zeros((B, 1), jnp.float32),
                       jnp.zeros((B, 1), jnp.float32)))

    return kernel


# ---------------- weight padding helpers (wrapper side, exact zeros) ---------

def _pad_gates(w, h_real, h_pad):
    """(Din, 4*h_real) -> (Din, 4*h_pad); gate k placed at cols [k*h_pad, ...)."""
    din = w.shape[0]
    out = jnp.zeros((din, 4 * h_pad), w.dtype)
    for k in range(4):
        out = out.at[:, k * h_pad:k * h_pad + h_real].set(
            w[:, k * h_real:(k + 1) * h_real])
    return out


def _pad_rows(w, rows_pad):
    """(Din, C) -> (rows_pad, C) with zero rows appended."""
    return jnp.zeros((rows_pad, w.shape[1]), w.dtype).at[:w.shape[0]].set(w)


# ---------------------------------- wrapper ----------------------------------

def lstm_autoencoder(x_btd, params):
    """x_btd: (B, T, INPUT_SIZE) float32, batch-first like PyTorch."""
    B, T, _ = x_btd.shape
    Bp = max(8, ((B + 7) // 8) * 8)                  # pad batch to f32 sublane
    H, L = HIDDEN_SIZE, LATENT_SIZE

    x = jnp.transpose(x_btd, (1, 0, 2)).astype(jnp.float32)   # (T, B, 1)
    if Bp != B:
        x = jnp.pad(x, ((0, 0), (0, Bp - B), (0, 0)))
    x2 = x.reshape(T * Bp, INPUT_SIZE)

    (w1, u1, b1), (w2, u2, b2), (w3, u3, b3), (w4, u4, b4) = params
    # Pad the 16-wide latent layer so every gate occupies a full 128-lane tile,
    # and pad the latent->hidden input weights to 128 rows.  Zeros are exact.
    w2p = _pad_gates(w2, L, H)                       # (128, 512)
    u2p = _pad_rows(_pad_gates(u2, L, H), H)         # (128, 512)
    b2p = _pad_gates(b2, L, H)                       # (1, 512)
    w3p = _pad_rows(w3, H)                           # (128, 512)

    flat = [w1, u1, b1, w2p, u2p, b2p, w3p, u3, b3, w4, u4, b4]

    vmem = pl.BlockSpec(memory_space=pltpu.MemorySpace.VMEM)
    TB = T * Bp
    # TODO(synk): for large B, add a batch-tile grid with
    # dimension_semantics=("parallel",) to use the second TensorCore on v7x.
    y2 = pl.pallas_call(
        make_lstm_ae_kernel(T, Bp),
        out_shape=jax.ShapeDtypeStruct((TB, OUTPUT_SIZE), jnp.float32),
        in_specs=[vmem] * (1 + len(flat)),
        out_specs=vmem,
        scratch_shapes=[
            pltpu.VMEM((TB, H), jnp.float32),        # a1: layer-1 / layer-3 out
            pltpu.VMEM((TB, H), jnp.float32),        # a2: layer-2 (latent) out
            pltpu.VMEM((TB, 4 * H), jnp.float32),    # z : hoisted i2h (+bias)
        ],
        compiler_params=pltpu.CompilerParams(
            vmem_limit_bytes=32 * 1024 * 1024),
    )(x2, *flat)

    y = y2.reshape(T, Bp, OUTPUT_SIZE)[:, :B]        # drop batch padding
    return jnp.transpose(y, (1, 0, 2))               # back to (B, T, 1)


# --------------------------- params & pure-JAX reference ---------------------

def init_lstm_params(key, din, h):
    """PyTorch-style init: U(-1/sqrt(H), 1/sqrt(H)); returns transposed weights."""
    k = 1.0 / (h ** 0.5)
    k1, k2, k3, k4 = jax.random.split(key, 4)
    w_ih = jax.random.uniform(k1, (4 * h, din), jnp.float32, -k, k)
    w_hh = jax.random.uniform(k2, (4 * h, h), jnp.float32, -k, k)
    b_ih = jax.random.uniform(k3, (4 * h,), jnp.float32, -k, k)
    b_hh = jax.random.uniform(k4, (4 * h,), jnp.float32, -k, k)
    return (w_ih.T, w_hh.T, (b_ih + b_hh).reshape(1, 4 * h))


def lstm_layer_ref(x_tbd, wih_t, whh_t, bias):
    """Pure-JAX reference (lax.scan) matching torch.nn.LSTM, zero init state."""
    T, B, _ = x_tbd.shape
    H = whh_t.shape[0]

    def step(carry, x_t):
        h, c = carry
        z = x_t @ wih_t + h @ whh_t + bias
        i = jax.nn.sigmoid(z[:, 0 * H:1 * H])
        f = jax.nn.sigmoid(z[:, 1 * H:2 * H])
        g = jnp.tanh(z[:, 2 * H:3 * H])
        o = jax.nn.sigmoid(z[:, 3 * H:4 * H])
        c = f * c + i * g
        h = o * jnp.tanh(c)
        return (h, c), h

    init = (jnp.zeros((B, H), jnp.float32), jnp.zeros((B, H), jnp.float32))
    _, ys = lax.scan(step, init, x_tbd)
    return ys


def lstm_autoencoder_ref(x_btd, params):
    x = jnp.transpose(x_btd, (1, 0, 2)).astype(jnp.float32)
    for (wih_t, whh_t, bias) in params:
        x = lstm_layer_ref(x, wih_t, whh_t, bias)
    return jnp.transpose(x, (1, 0, 2))


if __name__ == "__main__":
    key = jax.random.PRNGKey(0)
    key, xk = jax.random.split(key)

    B, T = 2, 8
    x = jax.random.normal(xk, (B, T, INPUT_SIZE), jnp.float32)

    params = []
    for (din, h) in LAYER_DIMS:
        key, pk = jax.random.split(key)
        params.append(init_lstm_params(pk, din, h))

    y = lstm_autoencoder(x, params)
    jax.block_until_ready(y)

    y_ref = lstm_autoencoder_ref(x, params)
    assert y.shape == (B, T, OUTPUT_SIZE), y.shape
    assert jnp.allclose(y, y_ref, atol=1e-5, rtol=1e-5), (
        float(jnp.max(jnp.abs(y - y_ref))))

    print("KERNEL_OK")
</pallas_src>

<mosaic_0001>
module attributes {stable_mosaic.version = 11 : i64} {
  func.func @kernel(%arg0: memref<64x1xf32, #tpu.memory_space<vmem>>, %arg1: memref<1x512xf32, #tpu.memory_space<vmem>>, %arg2: memref<128x512xf32, #tpu.memory_space<vmem>>, %arg3: memref<1x512xf32, #tpu.memory_space<vmem>>, %arg4: memref<128x512xf32, #tpu.memory_space<vmem>>, %arg5: memref<128x512xf32, #tpu.memory_space<vmem>>, %arg6: memref<1x512xf32, #tpu.memory_space<vmem>>, %arg7: memref<128x512xf32, #tpu.memory_space<vmem>>, %arg8: memref<128x512xf32, #tpu.memory_space<vmem>>, %arg9: memref<1x512xf32, #tpu.memory_space<vmem>>, %arg10: memref<128x4xf32, #tpu.memory_space<vmem>>, %arg11: memref<1x4xf32, #tpu.memory_space<vmem>>, %arg12: memref<1x4xf32, #tpu.memory_space<vmem>>, %arg13: memref<64x1xf32, #tpu.memory_space<vmem>>, %arg14: memref<64x128xf32, #tpu.memory_space<vmem>>, %arg15: memref<64x128xf32, #tpu.memory_space<vmem>>, %arg16: memref<64x512xf32, #tpu.memory_space<vmem>>) attributes {dimension_semantics = [], scalar_prefetch = 0 : i64, scratch_operands = 3 : i64, tpu.core_type = #tpu.core_type<tc>} {
    %c0 = arith.constant 0 : index
    %c0_0 = arith.constant 0 : index
    %0 = vector.load %arg0[%c0, %c0_0] : memref<64x1xf32, #tpu.memory_space<vmem>>, vector<64x1xf32>
    %c0_1 = arith.constant 0 : index
    %c0_2 = arith.constant 0 : index
    %1 = vector.load %arg1[%c0_1, %c0_2] : memref<1x512xf32, #tpu.memory_space<vmem>>, vector<1x512xf32>
    %2 = vector.broadcast %0 : vector<64x1xf32> to vector<64x512xf32>
    %3 = vector.broadcast %1 : vector<1x512xf32> to vector<64x512xf32>
    %4 = arith.mulf %2, %3 : vector<64x512xf32>
    %c0_3 = arith.constant 0 : index
    %c0_4 = arith.constant 0 : index
    %5 = vector.load %arg3[%c0_3, %c0_4] : memref<1x512xf32, #tpu.memory_space<vmem>>, vector<1x512xf32>
    %6 = vector.broadcast %5 : vector<1x512xf32> to vector<64x512xf32>
    %7 = arith.addf %4, %6 : vector<64x512xf32>
    %c0_5 = arith.constant 0 : index
    %c0_6 = arith.constant 0 : index
    %8 = vector.load %arg16[%c0_5, %c0_6] : memref<64x512xf32, #tpu.memory_space<vmem>>, vector<64x512xf32>
    tpu.vector_store %arg16[%c0_5, %c0_6], %7 {strides = array<i32>} : memref<64x512xf32, #tpu.memory_space<vmem>>, vector<64x512xf32>,
    %c0_7 = arith.constant 0 : index
    %c0_8 = arith.constant 0 : index
    %9 = vector.load %arg2[%c0_7, %c0_8] : memref<128x512xf32, #tpu.memory_space<vmem>>, vector<128x512xf32>
    %cst = arith.constant 0.000000e+00 : f32
    %10 = vector.broadcast %cst : f32 to vector<8x128xf32>
    %cst_9 = arith.constant 0.000000e+00 : f32
    %11 = vector.broadcast %cst_9 : f32 to vector<8x128xf32>
    %c0_i32 = arith.constant 0 : i32
    %c8_i32 = arith.constant 8 : i32
    %12 = arith.addi %c0_i32, %c8_i32 : i32
    %c1_i32 = arith.constant 1 : i32
    %13:2 = scf.for %arg17 = %c0_i32 to %12 step %c1_i32 iter_args(%arg18 = %10, %arg19 = %11) -> (vector<8x128xf32>, vector<8x128xf32>)  : i32 {
      %c8_i32_62 = arith.constant 8 : i32
      %50 = arith.muli %arg17, %c8_i32_62 : i32
      %51 = tpu.assume_multiple %50, 8 : i32
      %52 = arith.index_cast %51 : i32 to index
      %c0_63 = arith.constant 0 : index
      %53 = vector.load %arg16[%52, %c0_63] : memref<64x512xf32, #tpu.memory_space<vmem>>, vector<8x512xf32>
      %cst_64 = arith.constant dense<0.000000e+00> : vector<8x512xf32>
      %54 = tpu.matmul %arg18, %9, %cst_64 {dimension_numbers = #tpu.dot_dimension_numbers<[1], [0], [0], [1], [0, 0, 1, 1], [], []>} : vector<8x128xf32>, vector<128x512xf32>, vector<8x512xf32> -> vector<8x512xf32>
      %55 = arith.addf %53, %54 : vector<8x512xf32>
      %56 = vector.extract_strided_slice %55 {offsets = [0, 0], sizes = [8, 128], strides = [1, 1]} : vector<8x512xf32> to vector<8x128xf32>
      %57 = arith.negf %56 : vector<8x128xf32>
      %58 = math.exp %57 : vector<8x128xf32>
      %cst_65 = arith.constant 1.000000e+00 : f32
      %59 = vector.broadcast %cst_65 : f32 to vector<8x128xf32>
      %60 = arith.addf %59, %58 : vector<8x128xf32>
      %61 = arith.divf %59, %60 : vector<8x128xf32>
      %62 = vector.extract_strided_slice %55 {offsets = [0, 128], sizes = [8, 128], strides = [1, 1]} : vector<8x512xf32> to vector<8x128xf32>
      %63 = arith.negf %62 : vector<8x128xf32>
      %64 = math.exp %63 : vector<8x128xf32>
      %cst_66 = arith.constant 1.000000e+00 : f32
      %65 = vector.broadcast %cst_66 : f32 to vector<8x128xf32>
      %66 = arith.addf %65, %64 : vector<8x128xf32>
      %67 = arith.divf %65, %66 : vector<8x128xf32>
      %68 = vector.extract_strided_slice %55 {offsets = [0, 256], sizes = [8, 128], strides = [1, 1]} : vector<8x512xf32> to vector<8x128xf32>
      %69 = math.tanh %68 : vector<8x128xf32>
      %70 = vector.extract_strided_slice %55 {offsets = [0, 384], sizes = [8, 128], strides = [1, 1]} : vector<8x512xf32> to vector<8x128xf32>
      %71 = arith.negf %70 : vector<8x128xf32>
      %72 = math.exp %71 : vector<8x128xf32>
      %cst_67 = arith.constant 1.000000e+00 : f32
      %73 = vector.broadcast %cst_67 : f32 to vector<8x128xf32>
      %74 = arith.addf %73, %72 : vector<8x128xf32>
      %75 = arith.divf %73, %74 : vector<8x128xf32>
      %76 = arith.mulf %67, %arg19 : vector<8x128xf32>
      %77 = arith.mulf %61, %69 : vector<8x128xf32>
      %78 = arith.addf %76, %77 : vector<8x128xf32>
      %79 = math.tanh %78 : vector<8x128xf32>
      %80 = arith.mulf %75, %79 : vector<8x128xf32>
      %81 = arith.index_cast %51 : i32 to index
      %c0_68 = arith.constant 0 : index
      %82 = vector.load %arg14[%81, %c0_68] : memref<64x128xf32, #tpu.memory_space<vmem>>, vector<8x128xf32>
      tpu.vector_store %arg14[%81, %c0_68], %80 {strides = array<i32>} : memref<64x128xf32, #tpu.memory_space<vmem>>, vector<8x128xf32>,
      scf.yield %80, %78 : vector<8x128xf32>, vector<8x128xf32>
    }
    %c8_i32_10 = arith.constant 8 : i32
    %c0_11 = arith.constant 0 : index
    %c0_12 = arith.constant 0 : index
    %14 = vector.load %arg14[%c0_11, %c0_12] : memref<64x128xf32, #tpu.memory_space<vmem>>, vector<64x128xf32>
    %c0_13 = arith.constant 0 : index
    %c0_14 = arith.constant 0 : index
    %15 = vector.load %arg4[%c0_13, %c0_14] : memref<128x512xf32, #tpu.memory_space<vmem>>, vector<128x512xf32>
    %cst_15 = arith.constant dense<0.000000e+00> : vector<64x512xf32>
    %16 = tpu.matmul %14, %15, %cst_15 {dimension_numbers = #tpu.dot_dimension_numbers<[1], [0], [0], [1], [0, 0, 1, 1], [], []>} : vector<64x128xf32>, vector<128x512xf32>, vector<64x512xf32> -> vector<64x512xf32>
    %c0_16 = arith.constant 0 : index
    %c0_17 = arith.constant 0 : index
    %17 = vector.load %arg6[%c0_16, %c0_17] : memref<1x512xf32, #tpu.memory_space<vmem>>, vector<1x512xf32>
    %18 = vector.broadcast %17 : vector<1x512xf32> to vector<64x512xf32>
    %19 = arith.addf %16, %18 : vector<64x512xf32>
    %c0_18 = arith.constant 0 : index
    %c0_19 = arith.constant 0 : index
    %20 = vector.load %arg16[%c0_18, %c0_19] : memref<64x512xf32, #tpu.memory_space<vmem>>, vector<64x512xf32>
    tpu.vector_store %arg16[%c0_18, %c0_19], %19 {strides = array<i32>} : memref<64x512xf32, #tpu.memory_space<vmem>>, vector<64x512xf32>,
    %c0_20 = arith.constant 0 : index
    %c0_21 = arith.constant 0 : index
    %21 = vector.load %arg5[%c0_20, %c0_21] : memref<128x512xf32, #tpu.memory_space<vmem>>, vector<128x512xf32>
    %cst_22 = arith.constant 0.000000e+00 : f32
    %22 = vector.broadcast %cst_22 : f32 to vector<8x128xf32>
    %cst_23 = arith.constant 0.000000e+00 : f32
    %23 = vector.broadcast %cst_23 : f32 to vector<8x128xf32>
    %c0_i32_24 = arith.constant 0 : i32
    %c8_i32_25 = arith.constant 8 : i32
    %24 = arith.addi %c0_i32_24, %c8_i32_25 : i32
    %c1_i32_26 = arith.constant 1 : i32
    %25:2 = scf.for %arg17 = %c0_i32_24 to %24 step %c1_i32_26 iter_args(%arg18 = %22, %arg19 = %23) -> (vector<8x128xf32>, vector<8x128xf32>)  : i32 {
      %c8_i32_62 = arith.constant 8 : i32
      %50 = arith.muli %arg17, %c8_i32_62 : i32
      %51 = tpu.assume_multiple %50, 8 : i32
      %52 = arith.index_cast %51 : i32 to index
      %c0_63 = arith.constant 0 : index
      %53 = vector.load %arg16[%52, %c0_63] : memref<64x512xf32, #tpu.memory_space<vmem>>, vector<8x512xf32>
      %cst_64 = arith.constant dense<0.000000e+00> : vector<8x512xf32>
      %54 = tpu.matmul %arg18, %21, %cst_64 {dimension_numbers = #tpu.dot_dimension_numbers<[1], [0], [0], [1], [0, 0, 1, 1], [], []>} : vector<8x128xf32>, vector<128x512xf32>, vector<8x512xf32> -> vector<8x512xf32>
      %55 = arith.addf %53, %54 : vector<8x512xf32>
      %56 = vector.extract_strided_slice %55 {offsets = [0, 0], sizes = [8, 128], strides = [1, 1]} : vector<8x512xf32> to vector<8x128xf32>
      %57 = arith.negf %56 : vector<8x128xf32>
      %58 = math.exp %57 : vector<8x128xf32>
      %cst_65 = arith.constant 1.000000e+00 : f32
      %59 = vector.broadcast %cst_65 : f32 to vector<8x128xf32>
      %60 = arith.addf %59, %58 : vector<8x128xf32>
      %61 = arith.divf %59, %60 : vector<8x128xf32>
      %62 = vector.extract_strided_slice %55 {offsets = [0, 128], sizes = [8, 128], strides = [1, 1]} : vector<8x512xf32> to vector<8x128xf32>
      %63 = arith.negf %62 : vector<8x128xf32>
      %64 = math.exp %63 : vector<8x128xf32>
      %cst_66 = arith.constant 1.000000e+00 : f32
      %65 = vector.broadcast %cst_66 : f32 to vector<8x128xf32>
      %66 = arith.addf %65, %64 : vector<8x128xf32>
      %67 = arith.divf %65, %66 : vector<8x128xf32>
      %68 = vector.extract_strided_slice %55 {offsets = [0, 256], sizes = [8, 128], strides = [1, 1]} : vector<8x512xf32> to vector<8x128xf32>
      %69 = math.tanh %68 : vector<8x128xf32>
      %70 = vector.extract_strided_slice %55 {offsets = [0, 384], sizes = [8, 128], strides = [1, 1]} : vector<8x512xf32> to vector<8x128xf32>
      %71 = arith.negf %70 : vector<8x128xf32>
      %72 = math.exp %71 : vector<8x128xf32>
      %cst_67 = arith.constant 1.000000e+00 : f32
      %73 = vector.broadcast %cst_67 : f32 to vector<8x128xf32>
      %74 = arith.addf %73, %72 : vector<8x128xf32>
      %75 = arith.divf %73, %74 : vector<8x128xf32>
      %76 = arith.mulf %67, %arg19 : vector<8x128xf32>
      %77 = arith.mulf %61, %69 : vector<8x128xf32>
      %78 = arith.addf %76, %77 : vector<8x128xf32>
      %79 = math.tanh %78 : vector<8x128xf32>
      %80 = arith.mulf %75, %79 : vector<8x128xf32>
      %81 = arith.index_cast %51 : i32 to index
      %c0_68 = arith.constant 0 : index
      %82 = vector.load %arg15[%81, %c0_68] : memref<64x128xf32, #tpu.memory_space<vmem>>, vector<8x128xf32>
      tpu.vector_store %arg15[%81, %c0_68], %80 {strides = array<i32>} : memref<64x128xf32, #tpu.memory_space<vmem>>, vector<8x128xf32>,
      scf.yield %80, %78 : vector<8x128xf32>, vector<8x128xf32>
    }
    %c8_i32_27 = arith.constant 8 : i32
    %c0_28 = arith.constant 0 : index
    %c0_29 = arith.constant 0 : index
    %26 = vector.load %arg15[%c0_28, %c0_29] : memref<64x128xf32, #tpu.memory_space<vmem>>, vector<64x128xf32>
    %c0_30 = arith.constant 0 : index
    %c0_31 = arith.constant 0 : index
    %27 = vector.load %arg7[%c0_30, %c0_31] : memref<128x512xf32, #tpu.memory_space<vmem>>, vector<128x512xf32>
    %cst_32 = arith.constant dense<0.000000e+00> : vector<64x512xf32>
    %28 = tpu.matmul %26, %27, %cst_32 {dimension_numbers = #tpu.dot_dimension_numbers<[1], [0], [0], [1], [0, 0, 1, 1], [], []>} : vector<64x128xf32>, vector<128x512xf32>, vector<64x512xf32> -> vector<64x512xf32>
    %c0_33 = arith.constant 0 : index
    %c0_34 = arith.constant 0 : index
    %29 = vector.load %arg9[%c0_33, %c0_34] : memref<1x512xf32, #tpu.memory_space<vmem>>, vector<1x512xf32>
    %30 = vector.broadcast %29 : vector<1x512xf32> to vector<64x512xf32>
    %31 = arith.addf %28, %30 : vector<64x512xf32>
    %c0_35 = arith.constant 0 : index
    %c0_36 = arith.constant 0 : index
    %32 = vector.load %arg16[%c0_35, %c0_36] : memref<64x512xf32, #tpu.memory_space<vmem>>, vector<64x512xf32>
    tpu.vector_store %arg16[%c0_35, %c0_36], %31 {strides = array<i32>} : memref<64x512xf32, #tpu.memory_space<vmem>>, vector<64x512xf32>,
    %c0_37 = arith.constant 0 : index
    %c0_38 = arith.constant 0 : index
    %33 = vector.load %arg8[%c0_37, %c0_38] : memref<128x512xf32, #tpu.memory_space<vmem>>, vector<128x512xf32>
    %cst_39 = arith.constant 0.000000e+00 : f32
    %34 = vector.broadcast %cst_39 : f32 to vector<8x128xf32>
    %cst_40 = arith.constant 0.000000e+00 : f32
    %35 = vector.broadcast %cst_40 : f32 to vector<8x128xf32>
    %c0_i32_41 = arith.constant 0 : i32
    %c8_i32_42 = arith.constant 8 : i32
    %36 = arith.addi %c0_i32_41, %c8_i32_42 : i32
    %c1_i32_43 = arith.constant 1 : i32
    %37:2 = scf.for %arg17 = %c0_i32_41 to %36 step %c1_i32_43 iter_args(%arg18 = %34, %arg19 = %35) -> (vector<8x128xf32>, vector<8x128xf32>)  : i32 {
      %c8_i32_62 = arith.constant 8 : i32
      %50 = arith.muli %arg17, %c8_i32_62 : i32
      %51 = tpu.assume_multiple %50, 8 : i32
      %52 = arith.index_cast %51 : i32 to index
      %c0_63 = arith.constant 0 : index
      %53 = vector.load %arg16[%52, %c0_63] : memref<64x512xf32, #tpu.memory_space<vmem>>, vector<8x512xf32>
      %cst_64 = arith.constant dense<0.000000e+00> : vector<8x512xf32>
      %54 = tpu.matmul %arg18, %33, %cst_64 {dimension_numbers = #tpu.dot_dimension_numbers<[1], [0], [0], [1], [0, 0, 1, 1], [], []>} : vector<8x128xf32>, vector<128x512xf32>, vector<8x512xf32> -> vector<8x512xf32>
      %55 = arith.addf %53, %54 : vector<8x512xf32>
      %56 = vector.extract_strided_slice %55 {offsets = [0, 0], sizes = [8, 128], strides = [1, 1]} : vector<8x512xf32> to vector<8x128xf32>
      %57 = arith.negf %56 : vector<8x128xf32>
      %58 = math.exp %57 : vector<8x128xf32>
      %cst_65 = arith.constant 1.000000e+00 : f32
      %59 = vector.broadcast %cst_65 : f32 to vector<8x128xf32>
      %60 = arith.addf %59, %58 : vector<8x128xf32>
      %61 = arith.divf %59, %60 : vector<8x128xf32>
      %62 = vector.extract_strided_slice %55 {offsets = [0, 128], sizes = [8, 128], strides = [1, 1]} : vector<8x512xf32> to vector<8x128xf32>
      %63 = arith.negf %62 : vector<8x128xf32>
      %64 = math.exp %63 : vector<8x128xf32>
      %cst_66 = arith.constant 1.000000e+00 : f32
      %65 = vector.broadcast %cst_66 : f32 to vector<8x128xf32>
      %66 = arith.addf %65, %64 : vector<8x128xf32>
      %67 = arith.divf %65, %66 : vector<8x128xf32>
      %68 = vector.extract_strided_slice %55 {offsets = [0, 256], sizes = [8, 128], strides = [1, 1]} : vector<8x512xf32> to vector<8x128xf32>
      %69 = math.tanh %68 : vector<8x128xf32>
      %70 = vector.extract_strided_slice %55 {offsets = [0, 384], sizes = [8, 128], strides = [1, 1]} : vector<8x512xf32> to vector<8x128xf32>
      %71 = arith.negf %70 : vector<8x128xf32>
      %72 = math.exp %71 : vector<8x128xf32>
      %cst_67 = arith.constant 1.000000e+00 : f32
      %73 = vector.broadcast %cst_67 : f32 to vector<8x128xf32>
      %74 = arith.addf %73, %72 : vector<8x128xf32>
      %75 = arith.divf %73, %74 : vector<8x128xf32>
      %76 = arith.mulf %67, %arg19 : vector<8x128xf32>
      %77 = arith.mulf %61, %69 : vector<8x128xf32>
      %78 = arith.addf %76, %77 : vector<8x128xf32>
      %79 = math.tanh %78 : vector<8x128xf32>
      %80 = arith.mulf %75, %79 : vector<8x128xf32>
      %81 = arith.index_cast %51 : i32 to index
      %c0_68 = arith.constant 0 : index
      %82 = vector.load %arg14[%81, %c0_68] : memref<64x128xf32, #tpu.memory_space<vmem>>, vector<8x128xf32>
      tpu.vector_store %arg14[%81, %c0_68], %80 {strides = array<i32>} : memref<64x128xf32, #tpu.memory_space<vmem>>, vector<8x128xf32>,
      scf.yield %80, %78 : vector<8x128xf32>, vector<8x128xf32>
    }
    %c8_i32_44 = arith.constant 8 : i32
    %c0_45 = arith.constant 0 : index
    %c0_46 = arith.constant 0 : index
    %38 = vector.load %arg14[%c0_45, %c0_46] : memref<64x128xf32, #tpu.memory_space<vmem>>, vector<64x128xf32>
    %c0_47 = arith.constant 0 : index
    %c0_48 = arith.constant 0 : index
    %39 = vector.load %arg10[%c0_47, %c0_48] : memref<128x4xf32, #tpu.memory_space<vmem>>, vector<128x4xf32>
    %cst_49 = arith.constant dense<0.000000e+00> : vector<64x4xf32>
    %40 = tpu.matmul %38, %39, %cst_49 {dimension_numbers = #tpu.dot_dimension_numbers<[1], [0], [0], [1], [0, 0, 1, 1], [], []>} : vector<64x128xf32>, vector<128x4xf32>, vector<64x4xf32> -> vector<64x4xf32>
    %c0_50 = arith.constant 0 : index
    %c0_51 = arith.constant 0 : index
    %41 = vector.load %arg12[%c0_50, %c0_51] : memref<1x4xf32, #tpu.memory_space<vmem>>, vector<1x4xf32>
    %42 = vector.broadcast %41 : vector<1x4xf32> to vector<64x4xf32>
    %43 = arith.addf %40, %42 : vector<64x4xf32>
    %c0_52 = arith.constant 0 : index
    %c0_53 = arith.constant 0 : index
    %44 = vector.load %arg16[%c0_52, %c0_53] : memref<64x512xf32, #tpu.memory_space<vmem>>, vector<64x4xf32>
    tpu.vector_store %arg16[%c0_52, %c0_53], %43 {strides = array<i32>} : memref<64x512xf32, #tpu.memory_space<vmem>>, vector<64x4xf32>,
    %c0_54 = arith.constant 0 : index
    %c0_55 = arith.constant 0 : index
    %45 = vector.load %arg11[%c0_54, %c0_55] : memref<1x4xf32, #tpu.memory_space<vmem>>, vector<1x4xf32>
    %cst_56 = arith.constant 0.000000e+00 : f32
    %46 = vector.broadcast %cst_56 : f32 to vector<8x1xf32>
    %cst_57 = arith.constant 0.000000e+00 : f32
    %47 = vector.broadcast %cst_57 : f32 to vector<8x1xf32>
    %c0_i32_58 = arith.constant 0 : i32
    %c8_i32_59 = arith.constant 8 : i32
    %48 = arith.addi %c0_i32_58, %c8_i32_59 : i32
    %c1_i32_60 = arith.constant 1 : i32
    %49:2 = scf.for %arg17 = %c0_i32_58 to %48 step %c1_i32_60 iter_args(%arg18 = %46, %arg19 = %47) -> (vector<8x1xf32>, vector<8x1xf32>)  : i32 {
      %c8_i32_62 = arith.constant 8 : i32
      %50 = arith.muli %arg17, %c8_i32_62 : i32
      %51 = tpu.assume_multiple %50, 8 : i32
      %52 = arith.index_cast %51 : i32 to index
      %c0_63 = arith.constant 0 : index
      %53 = vector.load %arg16[%52, %c0_63] : memref<64x512xf32, #tpu.memory_space<vmem>>, vector<8x4xf32>
      %54 = vector.broadcast %arg18 : vector<8x1xf32> to vector<8x4xf32>
      %55 = vector.broadcast %45 : vector<1x4xf32> to vector<8x4xf32>
      %56 = arith.mulf %54, %55 : vector<8x4xf32>
      %57 = arith.addf %53, %56 : vector<8x4xf32>
      %58 = vector.extract_strided_slice %57 {offsets = [0, 0], sizes = [8, 1], strides = [1, 1]} : vector<8x4xf32> to vector<8x1xf32>
      %59 = arith.negf %58 : vector<8x1xf32>
      %60 = math.exp %59 : vector<8x1xf32>
      %cst_64 = arith.constant 1.000000e+00 : f32
      %61 = vector.broadcast %cst_64 : f32 to vector<8x1xf32>
      %62 = arith.addf %61, %60 : vector<8x1xf32>
      %63 = arith.divf %61, %62 : vector<8x1xf32>
      %64 = vector.extract_strided_slice %57 {offsets = [0, 1], sizes = [8, 1], strides = [1, 1]} : vector<8x4xf32> to vector<8x1xf32>
      %65 = arith.negf %64 : vector<8x1xf32>
      %66 = math.exp %65 : vector<8x1xf32>
      %cst_65 = arith.constant 1.000000e+00 : f32
      %67 = vector.broadcast %cst_65 : f32 to vector<8x1xf32>
      %68 = arith.addf %67, %66 : vector<8x1xf32>
      %69 = arith.divf %67, %68 : vector<8x1xf32>
      %70 = vector.extract_strided_slice %57 {offsets = [0, 2], sizes = [8, 1], strides = [1, 1]} : vector<8x4xf32> to vector<8x1xf32>
      %71 = math.tanh %70 : vector<8x1xf32>
      %72 = vector.extract_strided_slice %57 {offsets = [0, 3], sizes = [8, 1], strides = [1, 1]} : vector<8x4xf32> to vector<8x1xf32>
      %73 = arith.negf %72 : vector<8x1xf32>
      %74 = math.exp %73 : vector<8x1xf32>
      %cst_66 = arith.constant 1.000000e+00 : f32
      %75 = vector.broadcast %cst_66 : f32 to vector<8x1xf32>
      %76 = arith.addf %75, %74 : vector<8x1xf32>
      %77 = arith.divf %75, %76 : vector<8x1xf32>
      %78 = arith.mulf %69, %arg19 : vector<8x1xf32>
      %79 = arith.mulf %63, %71 : vector<8x1xf32>
      %80 = arith.addf %78, %79 : vector<8x1xf32>
      %81 = math.tanh %80 : vector<8x1xf32>
      %82 = arith.mulf %77, %81 : vector<8x1xf32>
      %83 = arith.index_cast %51 : i32 to index
      %c0_67 = arith.constant 0 : index
      %84 = vector.load %arg13[%83, %c0_67] : memref<64x1xf32, #tpu.memory_space<vmem>>, vector<8x1xf32>
      tpu.vector_store %arg13[%83, %c0_67], %82 {strides = array<i32>} : memref<64x1xf32, #tpu.memory_space<vmem>>, vector<8x1xf32>,
      scf.yield %82, %80 : vector<8x1xf32>, vector<8x1xf32>
    }
    %c8_i32_61 = arith.constant 8 : i32
    return
  }
}

</mosaic_0001>

<llo_original>
// kernel: tpu_custom_call.1
$region0: #{tpu_custom_call.1}
  #allocation0 [shape = 'u32[]', space=smem, size = 0x4, offset = 0x4, fixed_abs, tag = 'smem constant byte address 0x4 - core index']
  #allocation1 [shape = 'u32[72,128]{1,0:T(1,128)}', space=vmem, size = 0x9000, scoped, tag = 'internal scratch']
  #allocation2 [shape = 'f32[64,128]{1,0:T(8,128)}', space=vmem, size = 0x8000, scoped, tag = 'scratch operand']
  #allocation3 [shape = 'f32[64,128]{1,0:T(8,128)}', space=vmem, size = 0x8000, scoped, tag = 'scratch operand']
  #allocation4 [shape = 'f32[64,512]{1,0:T(8,128)}', space=vmem, size = 0x20000, scoped, tag = 'scratch operand']
  %s0 = inlined_call_operand.vmem [shape: f32[64,1], index: 0, kind: input, shape index: {}]
  %s1 = inlined_call_operand.vmem [shape: f32[1,512], index: 1, kind: input, shape index: {}]
  %s2 = inlined_call_operand.hbm [shape: f32[128,512], index: 2, kind: input, shape index: {}]
  %s3 = inlined_call_operand.vmem [shape: f32[1,512], index: 3, kind: input, shape index: {}]
  %s4 = inlined_call_operand.hbm [shape: f32[128,512], index: 4, kind: input, shape index: {}]
  %s5 = inlined_call_operand.hbm [shape: f32[128,512], index: 5, kind: input, shape index: {}]
  %s6 = inlined_call_operand.vmem [shape: f32[1,512], index: 6, kind: input, shape index: {}]
  %s7 = inlined_call_operand.hbm [shape: f32[128,512], index: 7, kind: input, shape index: {}]
  %s8 = inlined_call_operand.hbm [shape: f32[128,512], index: 8, kind: input, shape index: {}]
  %s9 = inlined_call_operand.vmem [shape: f32[1,512], index: 9, kind: input, shape index: {}]
  %s10 = inlined_call_operand.vmem [shape: f32[128,4], index: 10, kind: input, shape index: {}]
  %s11 = inlined_call_operand.vmem [shape: f32[1,4], index: 11, kind: input, shape index: {}]
  %s12 = inlined_call_operand.vmem [shape: f32[1,4], index: 12, kind: input, shape index: {}]
  %s13 = inlined_call_operand.vmem [shape: f32[64,1], index: 13, kind: output, shape index: {}]
  %s14 = sld [smem:[#allocation0]]
  $region110: #{tpu_custom_call.1} parent=0
    _
  %s16 = ssub.s32 1, %s14
  %s17 = scalar_select 0, %s16, %s14
  $region1: #{tpu_custom_call.1} parent=0
    #allocation5 [shape = 'u8[262144]{0}', space=vmem, size = 0x40000, scoped, tag = 'input window, operand 2, single buffered']
    #allocation6 [shape = 's32[1]{0}', space=sflag, size = 0x4, scoped, tag = 'scoped memory for tpu_custom_call.1']
    #allocation7 [shape = 'u8[262144]{0}', space=vmem, size = 0x40000, scoped, tag = 'input window, operand 4, single buffered']
    #allocation8 [shape = 's32[1]{0}', space=sflag, size = 0x4, scoped, tag = 'scoped memory for tpu_custom_call.1']
    #allocation9 [shape = 'u8[262144]{0}', space=vmem, size = 0x40000, scoped, tag = 'input window, operand 5, single buffered']
    #allocation10 [shape = 'u8[262144]{0}', space=vmem, size = 0x40000, scoped, tag = 'input window, operand 7, single buffered']
    #allocation11 [shape = 's32[1]{0}', space=sflag, size = 0x4, scoped, tag = 'scoped memory for tpu_custom_call.1']
    #allocation12 [shape = 'u8[262144]{0}', space=vmem, size = 0x40000, scoped, tag = 'input window, operand 8, single buffered']
    %18 = vsyncpa [#allocation6], 0
    %19 = vsyncpa [#allocation8], 0
    %20 = vsyncpa [#allocation11], 0
    // Predicated region
    $region2: #{tpu_custom_call.1} parent=1 // pred_check
      _
    $region3: #{tpu_custom_call.1} parent=1 // pred_check_branch
      %22 = sbr.rel (0) target = $region5
    $region4: #{tpu_custom_call.1} parent=1 // pred_region
      _
    $region5: #{tpu_custom_call.1} parent=1 // pred_fallthru
      _
    // Predicated region
    $region6: #{tpu_custom_call.1} parent=1 // pred_check
      _
    $region7: #{tpu_custom_call.1} parent=1 // pred_check_branch
      %24 = sbr.rel (0) target = $region9
    $region8: #{tpu_custom_call.1} parent=1 // pred_region
      _
    $region9: #{tpu_custom_call.1} parent=1 // pred_fallthru
      _
    // Predicated region
    $region10: #{tpu_custom_call.1} parent=1 // pred_check
      _
    $region11: #{tpu_custom_call.1} parent=1 // pred_check_branch
      %26 = sbr.rel (0) target = $region13
    $region12: #{tpu_custom_call.1} parent=1 // pred_region
      %28 = vsyncadd [#allocation6], 0
      %s29 = sshll.u32 %s2, 4
      %s30 = int_to_ptr.hbm [resolvable:$true] %s29
      %s31 = sshll.u32 [#allocation5], 4
      %s32 = int_to_ptr.vmem [resolvable:$true] %s31
      %37 = dma.hbm_to_vmem [thread:$0]  %s30, 8192, %s32, [#allocation6], 512, 512, 32
    $region13: #{tpu_custom_call.1} parent=1 // pred_fallthru
      _
    // Predicated region
    $region14: #{tpu_custom_call.1} parent=1 // pred_check
      _
    $region15: #{tpu_custom_call.1} parent=1 // pred_check_branch
      %39 = sbr.rel (0) target = $region17
    $region16: #{tpu_custom_call.1} parent=1 // pred_region
      _
    $region17: #{tpu_custom_call.1} parent=1 // pred_fallthru
      _
    // Predicated region
    $region18: #{tpu_custom_call.1} parent=1 // pred_check
      _
    $region19: #{tpu_custom_call.1} parent=1 // pred_check_branch
      %41 = sbr.rel (0) target = $region21
    $region20: #{tpu_custom_call.1} parent=1 // pred_region
      %43 = vsyncadd [#allocation8], 0
      %s44 = sshll.u32 %s4, 4
      %s45 = int_to_ptr.hbm [resolvable:$true] %s44
      %s46 = sshll.u32 [#allocation7], 4
      %s47 = int_to_ptr.vmem [resolvable:$true] %s46
      %52 = dma.hbm_to_vmem [thread:$0]  %s45, 8192, %s47, [#allocation8], 512, 512, 32
    $region21: #{tpu_custom_call.1} parent=1 // pred_fallthru
      _
    // Predicated region
    $region22: #{tpu_custom_call.1} parent=1 // pred_check
      _
    $region23: #{tpu_custom_call.1} parent=1 // pred_check_branch
      %54 = sbr.rel (0) target = $region25
    $region24: #{tpu_custom_call.1} parent=1 // pred_region
      %56 = vsyncadd [#allocation8], 0
      %s57 = sshll.u32 %s5, 4
      %s58 = int_to_ptr.hbm [resolvable:$true] %s57
      %s59 = sshll.u32 [#allocation9], 4
      %s60 = int_to_ptr.vmem [resolvable:$true] %s59
      %65 = dma.hbm_to_vmem [thread:$0]  %s58, 8192, %s60, [#allocation8], 512, 512, 32
    $region25: #{tpu_custom_call.1} parent=1 // pred_fallthru
      _
    // Predicated region
    $region26: #{tpu_custom_call.1} parent=1 // pred_check
      _
    $region27: #{tpu_custom_call.1} parent=1 // pred_check_branch
      %67 = sbr.rel (0) target = $region29
    $region28: #{tpu_custom_call.1} parent=1 // pred_region
      _
    $region29: #{tpu_custom_call.1} parent=1 // pred_fallthru
      _
    // Predicated region
    $region30: #{tpu_custom_call.1} parent=1 // pred_check
      _
    $region31: #{tpu_custom_call.1} parent=1 // pred_check_branch
      %69 = sbr.rel (0) target = $region33
    $region32: #{tpu_custom_call.1} parent=1 // pred_region
      %71 = vsyncadd [#allocation11], 0
      %s72 = sshll.u32 %s7, 4
      %s73 = int_to_ptr.hbm [resolvable:$true] %s72
      %s74 = sshll.u32 [#allocation10], 4
      %s75 = int_to_ptr.vmem [resolvable:$true] %s74
      %80 = dma.hbm_to_vmem [thread:$0]  %s73, 8192, %s75, [#allocation11], 512, 512, 32
    $region33: #{tpu_custom_call.1} parent=1 // pred_fallthru
      _
    // Predicated region
    $region34: #{tpu_custom_call.1} parent=1 // pred_check
      _
    $region35: #{tpu_custom_call.1} parent=1 // pred_check_branch
      %82 = sbr.rel (0) target = $region37
    $region36: #{tpu_custom_call.1} parent=1 // pred_region
      %84 = vsyncadd [#allocation11], 0
      %s85 = sshll.u32 %s8, 4
      %s86 = int_to_ptr.hbm [resolvable:$true] %s85
      %s87 = sshll.u32 [#allocation12], 4
      %s88 = int_to_ptr.vmem [resolvable:$true] %s87
      %93 = dma.hbm_to_vmem [thread:$0]  %s86, 8192, %s88, [#allocation11], 512, 512, 32
    $region37: #{tpu_custom_call.1} parent=1 // pred_fallthru
      _
    // Predicated region
    $region38: #{tpu_custom_call.1} parent=1 // pred_check
      _
    $region39: #{tpu_custom_call.1} parent=1 // pred_check_branch
      %95 = sbr.rel (0) target = $region41
    $region40: #{tpu_custom_call.1} parent=1 // pred_region
      _
    $region41: #{tpu_custom_call.1} parent=1 // pred_fallthru
      _
    // Predicated region
    $region42: #{tpu_custom_call.1} parent=1 // pred_check
      _
    $region43: #{tpu_custom_call.1} parent=1 // pred_check_branch
      %97 = sbr.rel (0) target = $region45
    $region44: #{tpu_custom_call.1} parent=1 // pred_region
      _
    $region45: #{tpu_custom_call.1} parent=1 // pred_fallthru
      _
    // Predicated region
    $region46: #{tpu_custom_call.1} parent=1 // pred_check
      _
    $region47: #{tpu_custom_call.1} parent=1 // pred_check_branch
      %99 = sbr.rel (0) target = $region49
    $region48: #{tpu_custom_call.1} parent=1 // pred_region
      _
    $region49: #{tpu_custom_call.1} parent=1 // pred_fallthru
      _
    // Predicated region
    $region50: #{tpu_custom_call.1} parent=1 // pred_check
      _
    $region51: #{tpu_custom_call.1} parent=1 // pred_check_branch
      %101 = sbr.rel (0) target = $region53
    $region52: #{tpu_custom_call.1} parent=1 // pred_region
      _
    $region53: #{tpu_custom_call.1} parent=1 // pred_fallthru
      _
    // Predicated region
    $region54: #{tpu_custom_call.1} parent=1 // pred_check
      _
    $region55: #{tpu_custom_call.1} parent=1 // pred_check_branch
      %103 = sbr.rel (0) target = $region57
    $region56: #{tpu_custom_call.1} parent=1 // pred_region
      %105 = dma.done [#allocation6], 8192
    $region57: #{tpu_custom_call.1} parent=1 // pred_fallthru
      _
    // Predicated region
    $region58: #{tpu_custom_call.1} parent=1 // pred_check
      _
    $region59: #{tpu_custom_call.1} parent=1 // pred_check_branch
      %107 = sbr.rel (0) target = $region61
    $region60: #{tpu_custom_call.1} parent=1 // pred_region
      %109 = dma.done [#allocation8], 8192
    $region61: #{tpu_custom_call.1} parent=1 // pred_fallthru
      _
    // Predicated region
    $region62: #{tpu_custom_call.1} parent=1 // pred_check
      _
    $region63: #{tpu_custom_call.1} parent=1 // pred_check_branch
      %111 = sbr.rel (0) target = $region65
    $region64: #{tpu_custom_call.1} parent=1 // pred_region
      %113 = dma.done [#allocation8], 8192
    $region65: #{tpu_custom_call.1} parent=1 // pred_fallthru
      _
    // Predicated region
    $region66: #{tpu_custom_call.1} parent=1 // pred_check
      _
    $region67: #{tpu_custom_call.1} parent=1 // pred_check_branch
      %115 = sbr.rel (0) target = $region69
    $region68: #{tpu_custom_call.1} parent=1 // pred_region
      %117 = dma.done [#allocation11], 8192
    $region69: #{tpu_custom_call.1} parent=1 // pred_fallthru
      _
    // Predicated region
    $region70: #{tpu_custom_call.1} parent=1 // pred_check
      _
    $region71: #{tpu_custom_call.1} parent=1 // pred_check_branch
      %119 = sbr.rel (0) target = $region73
    $region72: #{tpu_custom_call.1} parent=1 // pred_region
      %121 = dma.done [#allocation11], 8192
    $region73: #{tpu_custom_call.1} parent=1 // pred_fallthru
      _
    %v122 = vld [vmem:[%s0] sm:$0xff]
    %v123 = vld [vmem:[%s0 + $0x8] sm:$0xff]
    %v124 = vld [vmem:[%s0 + $0x10] sm:$0xff]
    %v125 = vld [vmem:[%s0 + $0x18] sm:$0xff]
    %v126 = vld [vmem:[%s0 + $0x20] sm:$0xff]
    %v127 = vld [vmem:[%s0 + $0x28] sm:$0xff]
    %v128 = vld [vmem:[%s0 + $0x30] sm:$0xff]
    %v129 = vld [vmem:[%s0 + $0x38] sm:$0xff]
    %v130 = vld [vmem:[%s1] sm:$0xf]
    %132 = vset.pattern.permute.xlu0 0
    %133 = vperm.xlu0 %132, %v122
    %v134 = vpop.permute.xlu0 %133
    %137 = vset.pattern.permute.xlu0 0
    %138 = vperm.xlu0 %137, %v123
    %v139 = vpop.permute.xlu0 %138
    %142 = vset.pattern.permute.xlu0 0
    %143 = vperm.xlu0 %142, %v124
    %v144 = vpop.permute.xlu0 %143
    %147 = vset.pattern.permute.xlu0 0
    %148 = vperm.xlu0 %147, %v125
    %v149 = vpop.permute.xlu0 %148
    %152 = vset.pattern.permute.xlu0 0
    %153 = vperm.xlu0 %152, %v126
    %v154 = vpop.permute.xlu0 %153
    %157 = vset.pattern.permute.xlu0 0
    %158 = vperm.xlu0 %157, %v127
    %v159 = vpop.permute.xlu0 %158
    %162 = vset.pattern.permute.xlu0 0
    %163 = vperm.xlu0 %162, %v128
    %v164 = vpop.permute.xlu0 %163
    %167 = vset.pattern.permute.xlu0 0
    %168 = vperm.xlu0 %167, %v129
    %v169 = vpop.permute.xlu0 %168
    %v172 = vperm.slane %v130, 0
    %v173 = vperm.slane %v130, 1
    %v174 = vperm.slane %v130, 2
    %v175 = vperm.slane %v130, 3
    %v180 = vmul.f32 %v134, %v172
    %v181 = vmul.f32 %v134, %v173
    %v182 = vmul.f32 %v134, %v174
    %v183 = vmul.f32 %v134, %v175
    %v184 = vmul.f32 %v139, %v172
    %v185 = vmul.f32 %v139, %v173
    %v186 = vmul.f32 %v139, %v174
    %v187 = vmul.f32 %v139, %v175
    %v188 = vmul.f32 %v144, %v172
    %v189 = vmul.f32 %v144, %v173
    %v190 = vmul.f32 %v144, %v174
    %v191 = vmul.f32 %v144, %v175
    %v192 = vmul.f32 %v149, %v172
    %v193 = vmul.f32 %v149, %v173
    %v194 = vmul.f32 %v149, %v174
    %v195 = vmul.f32 %v149, %v175
    %v196 = vmul.f32 %v154, %v172
    %v197 = vmul.f32 %v154, %v173
    %v198 = vmul.f32 %v154, %v174
    %v199 = vmul.f32 %v154, %v175
    %v200 = vmul.f32 %v159, %v172
    %v201 = vmul.f32 %v159, %v173
    %v202 = vmul.f32 %v159, %v174
    %v203 = vmul.f32 %v159, %v175
    %v204 = vmul.f32 %v164, %v172
    %v205 = vmul.f32 %v164, %v173
    %v206 = vmul.f32 %v164, %v174
    %v207 = vmul.f32 %v164, %v175
    %v208 = vmul.f32 %v169, %v172
    %v209 = vmul.f32 %v169, %v173
    %v210 = vmul.f32 %v169, %v174
    %v211 = vmul.f32 %v169, %v175
    %v212 = vld [vmem:[%s3] sm:$0xf]
    %v214 = vperm.slane %v212, 0
    %v215 = vperm.slane %v212, 1
    %v216 = vperm.slane %v212, 2
    %v217 = vperm.slane %v212, 3
    %v222 = vadd.f32 %v180, %v214
    %v223 = vadd.f32 %v181, %v215
    %v224 = vadd.f32 %v182, %v216
    %v225 = vadd.f32 %v183, %v217
    %v226 = vadd.f32 %v184, %v214
    %v227 = vadd.f32 %v185, %v215
    %v228 = vadd.f32 %v186, %v216
    %v229 = vadd.f32 %v187, %v217
    %v230 = vadd.f32 %v188, %v214
    %v231 = vadd.f32 %v189, %v215
    %v232 = vadd.f32 %v190, %v216
    %v233 = vadd.f32 %v191, %v217
    %v234 = vadd.f32 %v192, %v214
    %v235 = vadd.f32 %v193, %v215
    %v236 = vadd.f32 %v194, %v216
    %v237 = vadd.f32 %v195, %v217
    %v238 = vadd.f32 %v196, %v214
    %v239 = vadd.f32 %v197, %v215
    %v240 = vadd.f32 %v198, %v216
    %v241 = vadd.f32 %v199, %v217
    %v242 = vadd.f32 %v200, %v214
    %v243 = vadd.f32 %v201, %v215
    %v244 = vadd.f32 %v202, %v216
    %v245 = vadd.f32 %v203, %v217
    %v246 = vadd.f32 %v204, %v214
    %v247 = vadd.f32 %v205, %v215
    %v248 = vadd.f32 %v206, %v216
    %v249 = vadd.f32 %v207, %v217
    %v250 = vadd.f32 %v208, %v214
    %v251 = vadd.f32 %v209, %v215
    %v252 = vadd.f32 %v210, %v216
    %v253 = vadd.f32 %v211, %v217
    %254 = vst [vmem:[#allocation4] sm:$0xff] %v222
    %255 = vst [vmem:[#allocation4 + $0x8] sm:$0xff] %v223
    %256 = vst [vmem:[#allocation4 + $0x10] sm:$0xff] %v224
    %257 = vst [vmem:[#allocation4 + $0x18] sm:$0xff] %v225
    %258 = vst [vmem:[#allocation4 + $0x20] sm:$0xff] %v226
    %259 = vst [vmem:[#allocation4 + $0x28] sm:$0xff] %v227
    %260 = vst [vmem:[#allocation4 + $0x30] sm:$0xff] %v228
    %261 = vst [vmem:[#allocation4 + $0x38] sm:$0xff] %v229
    %262 = vst [vmem:[#allocation4 + $0x40] sm:$0xff] %v230
    %263 = vst [vmem:[#allocation4 + $0x48] sm:$0xff] %v231
    %264 = vst [vmem:[#allocation4 + $0x50] sm:$0xff] %v232
    %265 = vst [vmem:[#allocation4 + $0x58] sm:$0xff] %v233
    %266 = vst [vmem:[#allocation4 + $0x60] sm:$0xff] %v234
    %267 = vst [vmem:[#allocation4 + $0x68] sm:$0xff] %v235
    %268 = vst [vmem:[#allocation4 + $0x70] sm:$0xff] %v236
    %269 = vst [vmem:[#allocation4 + $0x78] sm:$0xff] %v237
    %270 = vst [vmem:[#allocation4 + $0x80] sm:$0xff] %v238
    %271 = vst [vmem:[#allocation4 + $0x88] sm:$0xff] %v239
    %272 = vst [vmem:[#allocation4 + $0x90] sm:$0xff] %v240
    %273 = vst [vmem:[#allocation4 + $0x98] sm:$0xff] %v241
    %274 = vst [vmem:[#allocation4 + $0xa0] sm:$0xff] %v242
    %275 = vst [vmem:[#allocation4 + $0xa8] sm:$0xff] %v243
    %276 = vst [vmem:[#allocation4 + $0xb0] sm:$0xff] %v244
    %277 = vst [vmem:[#allocation4 + $0xb8] sm:$0xff] %v245
    %278 = vst [vmem:[#allocation4 + $0xc0] sm:$0xff] %v246
    %279 = vst [vmem:[#allocation4 + $0xc8] sm:$0xff] %v247
    %280 = vst [vmem:[#allocation4 + $0xd0] sm:$0xff] %v248
    %281 = vst [vmem:[#allocation4 + $0xd8] sm:$0xff] %v249
    %282 = vst [vmem:[#allocation4 + $0xe0] sm:$0xff] %v250
    %283 = vst [vmem:[#allocation4 + $0xe8] sm:$0xff] %v251
    %284 = vst [vmem:[#allocation4 + $0xf0] sm:$0xff] %v252
    %285 = vst [vmem:[#allocation4 + $0xf8] sm:$0xff] %v253
    %v286 = vld [vmem:[#allocation5] sm:$0xff]
    %v287 = vld [vmem:[#allocation5 + $0x8] sm:$0xff]
    %v288 = vld [vmem:[#allocation5 + $0x10] sm:$0xff]
    %v289 = vld [vmem:[#allocation5 + $0x18] sm:$0xff]
    %v290 = vld [vmem:[#allocation5 + $0x20] sm:$0xff]
    %v291 = vld [vmem:[#allocation5 + $0x28] sm:$0xff]
    %v292 = vld [vmem:[#allocation5 + $0x30] sm:$0xff]
    %v293 = vld [vmem:[#allocation5 + $0x38] sm:$0xff]
    %v294 = vld [vmem:[#allocation5 + $0x40] sm:$0xff]
    %v295 = vld [vmem:[#allocation5 + $0x48] sm:$0xff]
    %v296 = vld [vmem:[#allocation5 + $0x50] sm:$0xff]
    %v297 = vld [vmem:[#allocation5 + $0x58] sm:$0xff]
    %v298 = vld [vmem:[#allocation5 + $0x60] sm:$0xff]
    %v299 = vld [vmem:[#allocation5 + $0x68] sm:$0xff]
    %v300 = vld [vmem:[#allocation5 + $0x70] sm:$0xff]
    %v301 = vld [vmem:[#allocation5 + $0x78] sm:$0xff]
    %v302 = vld [vmem:[#allocation5 + $0x80] sm:$0xff]
    %v303 = vld [vmem:[#allocation5 + $0x88] sm:$0xff]
    %v304 = vld [vmem:[#allocation5 + $0x90] sm:$0xff]
    %v305 = vld [vmem:[#allocation5 + $0x98] sm:$0xff]
    %v306 = vld [vmem:[#allocation5 + $0xa0] sm:$0xff]
    %v307 = vld [vmem:[#allocation5 + $0xa8] sm:$0xff]
    %v308 = vld [vmem:[#allocation5 + $0xb0] sm:$0xff]
    %v309 = vld [vmem:[#allocation5 + $0xb8] sm:$0xff]
    %v310 = vld [vmem:[#allocation5 + $0xc0] sm:$0xff]
    %v311 = vld [vmem:[#allocation5 + $0xc8] sm:$0xff]
    %v312 = vld [vmem:[#allocation5 + $0xd0] sm:$0xff]
    %v313 = vld [vmem:[#allocation5 + $0xd8] sm:$0xff]
    %v314 = vld [vmem:[#allocation5 + $0xe0] sm:$0xff]
    %v315 = vld [vmem:[#allocation5 + $0xe8] sm:$0xff]
    %v316 = vld [vmem:[#allocation5 + $0xf0] sm:$0xff]
    %v317 = vld [vmem:[#allocation5 + $0xf8] sm:$0xff]
    %v318 = vld [vmem:[#allocation5 + $0x100] sm:$0xff]
    %v319 = vld [vmem:[#allocation5 + $0x108] sm:$0xff]
    %v320 = vld [vmem:[#allocation5 + $0x110] sm:$0xff]
    %v321 = vld [vmem:[#allocation5 + $0x118] sm:$0xff]
    %v322 = vld [vmem:[#allocation5 + $0x120] sm:$0xff]
    %v323 = vld [vmem:[#allocation5 + $0x128] sm:$0xff]
    %v324 = vld [vmem:[#allocation5 + $0x130] sm:$0xff]
    %v325 = vld [vmem:[#allocation5 + $0x138] sm:$0xff]
    %v326 = vld [vmem:[#allocation5 + $0x140] sm:$0xff]
    %v327 = vld [vmem:[#allocation5 + $0x148] sm:$0xff]
    %v328 = vld [vmem:[#allocation5 + $0x150] sm:$0xff]
    %v329 = vld [vmem:[#allocation5 + $0x158] sm:$0xff]
    %v330 = vld [vmem:[#allocation5 + $0x160] sm:$0xff]
    %v331 = vld [vmem:[#allocation5 + $0x168] sm:$0xff]
    %v332 = vld [vmem:[#allocation5 + $0x170] sm:$0xff]
    %v333 = vld [vmem:[#allocation5 + $0x178] sm:$0xff]
    %v334 = vld [vmem:[#allocation5 + $0x180] sm:$0xff]
    %v335 = vld [vmem:[#allocation5 + $0x188] sm:$0xff]
    %v336 = vld [vmem:[#allocation5 + $0x190] sm:$0xff]
    %v337 = vld [vmem:[#allocation5 + $0x198] sm:$0xff]
    %v338 = vld [vmem:[#allocation5 + $0x1a0] sm:$0xff]
    %v339 = vld [vmem:[#allocation5 + $0x1a8] sm:$0xff]
    %v340 = vld [vmem:[#allocation5 + $0x1b0] sm:$0xff]
    %v341 = vld [vmem:[#allocation5 + $0x1b8] sm:$0xff]
    %v342 = vld [vmem:[#allocation5 + $0x1c0] sm:$0xff]
    %v343 = vld [vmem:[#allocation5 + $0x1c8] sm:$0xff]
    %v344 = vld [vmem:[#allocation5 + $0x1d0] sm:$0xff]
    %v345 = vld [vmem:[#allocation5 + $0x1d8] sm:$0xff]
    %v346 = vld [vmem:[#allocation5 + $0x1e0] sm:$0xff]
    %v347 = vld [vmem:[#allocation5 + $0x1e8] sm:$0xff]
    %v348 = vld [vmem:[#allocation5 + $0x1f0] sm:$0xff]
    %v349 = vld [vmem:[#allocation5 + $0x1f8] sm:$0xff]
    loop: start=0, step=1, limit=8
    $region74: #{tpu_custom_call.1} parent=1 // loop_pre_header
      _
    $region75: #{tpu_custom_call.1} parent=1 // loop_header
      %s351 = sphi 0, %s355
      %p352 = scmp.ge.s32.totalorder %s351, 8
      %v356 = vphi 0.0, %v514
      %v357 = vphi 0.0, %v512
    $region76: #{tpu_custom_call.1} parent=1 // loop_header_branch
      %354 = sbr.rel (%p352) target = $region80
    $region77: #{tpu_custom_call.1} parent=1 // loop_body
      %s358 = smul.u32 %s351, 8
      %s359 = sshra.s32 %s358, 3
      %s360 = sand.u32 %s358, 7
      %s361 = smul.u32 %s359, 4
      %s362 = smul.addr %s361, 8
      %s363 = scalar_lea.vmem [#allocation4], %s362
      %v364 = vld [vmem:[%s363] sm:$0xff]
      %v365 = vld [vmem:[%s363 + $0x8] sm:$0xff]
      %v366 = vld [vmem:[%s363 + $0x10] sm:$0xff]
      %v367 = vld [vmem:[%s363 + $0x18] sm:$0xff]
      %368 = vmatpush.msra.mxu0 %v346
      %369 = vmatpush.msra.mxu0 %v342
      %370 = vmatpush.msra.mxu0 %v338
      %371 = vmatpush.msra.mxu0 %v334
      %372 = vmatpush.msra.mxu0 %v330
      %373 = vmatpush.msra.mxu0 %v326
      %374 = vmatpush.msra.mxu0 %v322
      %375 = vmatpush.msra.mxu0 %v318
      %376 = vmatpush.msra.mxu0 %v314
      %377 = vmatpush.msra.mxu0 %v310
      %378 = vmatpush.msra.mxu0 %v306
      %379 = vmatpush.msra.mxu0 %v302
      %380 = vmatpush.msra.mxu0 %v298
      %381 = vmatpush.msra.mxu0 %v294
      %382 = vmatpush.msra.mxu0 %v290
      %383 = vmatpush.msra.mxu0 %v286
      %384 = vmatmul.f32.gmra.mxu0 %v356
      %v385 = vpop.f32.mrf.mxu0
      %v386 = vadd.f32 0.0, %v385
      %387 = vdwg.mxu0
      %388 = vmatpush.msra.mxu0 %v347
      %389 = vmatpush.msra.mxu0 %v343
      %390 = vmatpush.msra.mxu0 %v339
      %391 = vmatpush.msra.mxu0 %v335
      %392 = vmatpush.msra.mxu0 %v331
      %393 = vmatpush.msra.mxu0 %v327
      %394 = vmatpush.msra.mxu0 %v323
      %395 = vmatpush.msra.mxu0 %v319
      %396 = vmatpush.msra.mxu0 %v315
      %397 = vmatpush.msra.mxu0 %v311
      %398 = vmatpush.msra.mxu0 %v307
      %399 = vmatpush.msra.mxu0 %v303
      %400 = vmatpush.msra.mxu0 %v299
      %401 = vmatpush.msra.mxu0 %v295
      %402 = vmatpush.msra.mxu0 %v291
      %403 = vmatpush.msra.mxu0 %v287
      %404 = vmatmul.f32.gmra.mxu0 %v356
      %v405 = vpop.f32.mrf.mxu0
      %v406 = vadd.f32 0.0, %v405
      %407 = vdwg.mxu0
      %408 = vmatpush.msra.mxu0 %v348
      %409 = vmatpush.msra.mxu0 %v344
      %410 = vmatpush.msra.mxu0 %v340
      %411 = vmatpush.msra.mxu0 %v336
      %412 = vmatpush.msra.mxu0 %v332
      %413 = vmatpush.msra.mxu0 %v328
      %414 = vmatpush.msra.mxu0 %v324
      %415 = vmatpush.msra.mxu0 %v320
      %416 = vmatpush.msra.mxu0 %v316
      %417 = vmatpush.msra.mxu0 %v312
      %418 = vmatpush.msra.mxu0 %v308
      %419 = vmatpush.msra.mxu0 %v304
      %420 = vmatpush.msra.mxu0 %v300
      %421 = vmatpush.msra.mxu0 %v296
      %422 = vmatpush.msra.mxu0 %v292
      %423 = vmatpush.msra.mxu0 %v288
      %424 = vmatmul.f32.gmra.mxu0 %v356
      %v425 = vpop.f32.mrf.mxu0
      %v426 = vadd.f32 0.0, %v425
      %427 = vdwg.mxu0
      %428 = vmatpush.msra.mxu0 %v349
      %429 = vmatpush.msra.mxu0 %v345
      %430 = vmatpush.msra.mxu0 %v341
      %431 = vmatpush.msra.mxu0 %v337
      %432 = vmatpush.msra.mxu0 %v333
      %433 = vmatpush.msra.mxu0 %v329
      %434 = vmatpush.msra.mxu0 %v325
      %435 = vmatpush.msra.mxu0 %v321
      %436 = vmatpush.msra.mxu0 %v317
      %437 = vmatpush.msra.mxu0 %v313
      %438 = vmatpush.msra.mxu0 %v309
      %439 = vmatpush.msra.mxu0 %v305
      %440 = vmatpush.msra.mxu0 %v301
      %441 = vmatpush.msra.mxu0 %v297
      %442 = vmatpush.msra.mxu0 %v293
      %443 = vmatpush.msra.mxu0 %v289
      %444 = vmatmul.f32.gmra.mxu0 %v356
      %v445 = vpop.f32.mrf.mxu0
      %v446 = vadd.f32 0.0, %v445
      %447 = vdwg.mxu0
      %v448 = vadd.f32 %v364, %v386
      %v449 = vadd.f32 %v365, %v406
      %v450 = vadd.f32 %v366, %v426
      %v451 = vadd.f32 %v367, %v446
      %v452 = vxor.u32 %v448, 2147483648
      %v453 = vmul.f32 %v452, 1.442695
      %v454 = vpow.pop %v453
      %v455 = vadd.f32 %v454, 1.0
      %v456 = vrcp.pop %v455
      %v457 = vmul.f32 %v455, %v456
      %v458 = vsub.f32 1.0, %v457
      %v459 = vmul.f32 %v456, %v458
      %v460 = vadd.f32 %v456, %v459
      %vm461 = vweird.f32 %v455
      %vm462 = vweird.f32 %v456
      %vm463 = vmor %vm461, %vm462
      %v464 = vsel %vm463, %v456, %v460
      %v465 = vand.u32 2147483647, %v455
      %vm466 = vcmp.eq.f32.partialorder %v465, 8.507059e+37
      %v467 = vand.u32 %v455, 2147483648
      %v468 = vor.u32 1.1754944e-38, %v467
      %v469 = vsel %vm466, %v468, %v464
      %v470 = vmul.f32 1.0, %v469
      %v471 = vxor.u32 %v449, 2147483648
      %v472 = vmul.f32 %v471, 1.442695
      %v473 = vpow.pop %v472
      %v474 = vadd.f32 %v473, 1.0
      %v475 = vrcp.pop %v474
      %v476 = vmul.f32 %v474, %v475
      %v477 = vsub.f32 1.0, %v476
      %v478 = vmul.f32 %v475, %v477
      %v479 = vadd.f32 %v475, %v478
      %vm480 = vweird.f32 %v474
      %vm481 = vweird.f32 %v475
      %vm482 = vmor %vm480, %vm481
      %v483 = vsel %vm482, %v475, %v479
      %v484 = vand.u32 2147483647, %v474
      %vm485 = vcmp.eq.f32.partialorder %v484, 8.507059e+37
      %v486 = vand.u32 %v474, 2147483648
      %v487 = vor.u32 1.1754944e-38, %v486
      %v488 = vsel %vm485, %v487, %v483
      %v489 = vmul.f32 1.0, %v488
      %v490 = vtanh.pop %v450
      %v491 = vxor.u32 %v451, 2147483648
      %v492 = vmul.f32 %v491, 1.442695
      %v493 = vpow.pop %v492
      %v494 = vadd.f32 %v493, 1.0
      %v495 = vrcp.pop %v494
      %v496 = vmul.f32 %v494, %v495
      %v497 = vsub.f32 1.0, %v496
      %v498 = vmul.f32 %v495, %v497
      %v499 = vadd.f32 %v495, %v498
      %vm500 = vweird.f32 %v494
      %vm501 = vweird.f32 %v495
      %vm502 = vmor %vm500, %vm501
      %v503 = vsel %vm502, %v495, %v499
      %v504 = vand.u32 2147483647, %v494
      %vm505 = vcmp.eq.f32.partialorder %v504, 8.507059e+37
      %v506 = vand.u32 %v494, 2147483648
      %v507 = vor.u32 1.1754944e-38, %v506
      %v508 = vsel %vm505, %v507, %v503
      %v509 = vmul.f32 1.0, %v508
      %v510 = vmul.f32 %v489, %v357
      %v511 = vmul.f32 %v470, %v490
      %v512 = vadd.f32 %v510, %v511
      %v513 = vtanh.pop %v512
      %v514 = vmul.f32 %v509, %v513
      %s515 = scalar_lea.vmem [#allocation2], %s358
      %516 = vst [vmem:[%s515] sm:$0xff] %v514
    $region78: #{tpu_custom_call.1} parent=1 // loop_footer
      %s355 = sadd.s32 1, %s351
    $region79: #{tpu_custom_call.1} parent=1 // loop_footer_branch
      %350 = sbr.rel target = $region75
    $region80: #{tpu_custom_call.1} parent=1 // loop_exit
      _
    %v517 = vld [vmem:[#allocation2] sm:$0xff]
    %v518 = vld [vmem:[#allocation2 + $0x8] sm:$0xff]
    %v519 = vld [vmem:[#allocation2 + $0x10] sm:$0xff]
    %v520 = vld [vmem:[#allocation2 + $0x18] sm:$0xff]
    %v521 = vld [vmem:[#allocation2 + $0x20] sm:$0xff]
    %v522 = vld [vmem:[#allocation2 + $0x28] sm:$0xff]
    %v523 = vld [vmem:[#allocation2 + $0x30] sm:$0xff]
    %v524 = vld [vmem:[#allocation2 + $0x38] sm:$0xff]
    %v525 = vld [vmem:[#allocation7] sm:$0xff]
    %v526 = vld [vmem:[#allocation7 + $0x8] sm:$0xff]
    %v527 = vld [vmem:[#allocation7 + $0x10] sm:$0xff]
    %v528 = vld [vmem:[#allocation7 + $0x18] sm:$0xff]
    %v529 = vld [vmem:[#allocation7 + $0x20] sm:$0xff]
    %v530 = vld [vmem:[#allocation7 + $0x28] sm:$0xff]
    %v531 = vld [vmem:[#allocation7 + $0x30] sm:$0xff]
    %v532 = vld [vmem:[#allocation7 + $0x38] sm:$0xff]
    %v533 = vld [vmem:[#allocation7 + $0x40] sm:$0xff]
    %v534 = vld [vmem:[#allocation7 + $0x48] sm:$0xff]
    %v535 = vld [vmem:[#allocation7 + $0x50] sm:$0xff]
    %v536 = vld [vmem:[#allocation7 + $0x58] sm:$0xff]
    %v537 = vld [vmem:[#allocation7 + $0x60] sm:$0xff]
    %v538 = vld [vmem:[#allocation7 + $0x68] sm:$0xff]
    %v539 = vld [vmem:[#allocation7 + $0x70] sm:$0xff]
    %v540 = vld [vmem:[#allocation7 + $0x78] sm:$0xff]
    %v541 = vld [vmem:[#allocation7 + $0x80] sm:$0xff]
    %v542 = vld [vmem:[#allocation7 + $0x88] sm:$0xff]
    %v543 = vld [vmem:[#allocation7 + $0x90] sm:$0xff]
    %v544 = vld [vmem:[#allocation7 + $0x98] sm:$0xff]
    %v545 = vld [vmem:[#allocation7 + $0xa0] sm:$0xff]
    %v546 = vld [vmem:[#allocation7 + $0xa8] sm:$0xff]
    %v547 = vld [vmem:[#allocation7 + $0xb0] sm:$0xff]
    %v548 = vld [vmem:[#allocation7 + $0xb8] sm:$0xff]
    %v549 = vld [vmem:[#allocation7 + $0xc0] sm:$0xff]
    %v550 = vld [vmem:[#allocation7 + $0xc8] sm:$0xff]
    %v551 = vld [vmem:[#allocation7 + $0xd0] sm:$0xff]
    %v552 = vld [vmem:[#allocation7 + $0xd8] sm:$0xff]
    %v553 = vld [vmem:[#allocation7 + $0xe0] sm:$0xff]
    %v554 = vld [vmem:[#allocation7 + $0xe8] sm:$0xff]
    %v555 = vld [vmem:[#allocation7 + $0xf0] sm:$0xff]
    %v556 = vld [vmem:[#allocation7 + $0xf8] sm:$0xff]
    %v557 = vld [vmem:[#allocation7 + $0x100] sm:$0xff]
    %v558 = vld [vmem:[#allocation7 + $0x108] sm:$0xff]
    %v559 = vld [vmem:[#allocation7 + $0x110] sm:$0xff]
    %v560 = vld [vmem:[#allocation7 + $0x118] sm:$0xff]
    %v561 = vld [vmem:[#allocation7 + $0x120] sm:$0xff]
    %v562 = vld [vmem:[#allocation7 + $0x128] sm:$0xff]
    %v563 = vld [vmem:[#allocation7 + $0x130] sm:$0xff]
    %v564 = vld [vmem:[#allocation7 + $0x138] sm:$0xff]
    %v565 = vld [vmem:[#allocation7 + $0x140] sm:$0xff]
    %v566 = vld [vmem:[#allocation7 + $0x148] sm:$0xff]
    %v567 = vld [vmem:[#allocation7 + $0x150] sm:$0xff]
    %v568 = vld [vmem:[#allocation7 + $0x158] sm:$0xff]
    %v569 = vld [vmem:[#allocation7 + $0x160] sm:$0xff]
    %v570 = vld [vmem:[#allocation7 + $0x168] sm:$0xff]
    %v571 = vld [vmem:[#allocation7 + $0x170] sm:$0xff]
    %v572 = vld [vmem:[#allocation7 + $0x178] sm:$0xff]
    %v573 = vld [vmem:[#allocation7 + $0x180] sm:$0xff]
    %v574 = vld [vmem:[#allocation7 + $0x188] sm:$0xff]
    %v575 = vld [vmem:[#allocation7 + $0x190] sm:$0xff]
    %v576 = vld [vmem:[#allocation7 + $0x198] sm:$0xff]
    %v577 = vld [vmem:[#allocation7 + $0x1a0] sm:$0xff]
    %v578 = vld [vmem:[#allocation7 + $0x1a8] sm:$0xff]
    %v579 = vld [vmem:[#allocation7 + $0x1b0] sm:$0xff]
    %v580 = vld [vmem:[#allocation7 + $0x1b8] sm:$0xff]
    %v581 = vld [vmem:[#allocation7 + $0x1c0] sm:$0xff]
    %v582 = vld [vmem:[#allocation7 + $0x1c8] sm:$0xff]
    %v583 = vld [vmem:[#allocation7 + $0x1d0] sm:$0xff]
    %v584 = vld [vmem:[#allocation7 + $0x1d8] sm:$0xff]
    %v585 = vld [vmem:[#allocation7 + $0x1e0] sm:$0xff]
    %v586 = vld [vmem:[#allocation7 + $0x1e8] sm:$0xff]
    %v587 = vld [vmem:[#allocation7 + $0x1f0] sm:$0xff]
    %v588 = vld [vmem:[#allocation7 + $0x1f8] sm:$0xff]
    %v589 = vld [vmem:[%s6] sm:$0xf]
    %v591 = vperm.slane %v589, 0
    %v592 = vperm.slane %v589, 1
    %v593 = vperm.slane %v589, 2
    %v594 = vperm.slane %v589, 3
    %599 = vmatpush.msra.mxu0 %v585
    %600 = vmatpush.msra.mxu0 %v581
    %601 = vmatpush.msra.mxu0 %v577
    %602 = vmatpush.msra.mxu0 %v573
    %603 = vmatpush.msra.mxu0 %v569
    %604 = vmatpush.msra.mxu0 %v565
    %605 = vmatpush.msra.mxu0 %v561
    %606 = vmatpush.msra.mxu0 %v557
    %607 = vmatpush.msra.mxu0 %v553
    %608 = vmatpush.msra.mxu0 %v549
    %609 = vmatpush.msra.mxu0 %v545
    %610 = vmatpush.msra.mxu0 %v541
    %611 = vmatpush.msra.mxu0 %v537
    %612 = vmatpush.msra.mxu0 %v533
    %613 = vmatpush.msra.mxu0 %v529
    %614 = vmatpush.msra.mxu0 %v525
    %615 = vmatmul.f32.gmra.mxu0 %v517
    %v616 = vpop.f32.mrf.mxu0
    %v617 = vadd.f32 %v591, %v616
    %618 = vmatmul.f32.gmra.mxu0 %v518
    %v619 = vpop.f32.mrf.mxu0
    %v620 = vadd.f32 %v591, %v619
    %621 = vmatmul.f32.gmra.mxu0 %v519
    %v622 = vpop.f32.mrf.mxu0
    %v623 = vadd.f32 %v591, %v622
    %624 = vmatmul.f32.gmra.mxu0 %v520
    %v625 = vpop.f32.mrf.mxu0
    %v626 = vadd.f32 %v591, %v625
    %627 = vmatmul.f32.gmra.mxu0 %v521
    %v628 = vpop.f32.mrf.mxu0
    %v629 = vadd.f32 %v591, %v628
    %630 = vmatmul.f32.gmra.mxu0 %v522
    %v631 = vpop.f32.mrf.mxu0
    %v632 = vadd.f32 %v591, %v631
    %633 = vmatmul.f32.gmra.mxu0 %v523
    %v634 = vpop.f32.mrf.mxu0
    %v635 = vadd.f32 %v591, %v634
    %636 = vmatmul.f32.gmra.mxu0 %v524
    %v637 = vpop.f32.mrf.mxu0
    %v638 = vadd.f32 %v591, %v637
    %639 = vdwg.mxu0
    %640 = vmatpush.msra.mxu0 %v586
    %641 = vmatpush.msra.mxu0 %v582
    %642 = vmatpush.msra.mxu0 %v578
    %643 = vmatpush.msra.mxu0 %v574
    %644 = vmatpush.msra.mxu0 %v570
    %645 = vmatpush.msra.mxu0 %v566
    %646 = vmatpush.msra.mxu0 %v562
    %647 = vmatpush.msra.mxu0 %v558
    %648 = vmatpush.msra.mxu0 %v554
    %649 = vmatpush.msra.mxu0 %v550
    %650 = vmatpush.msra.mxu0 %v546
    %651 = vmatpush.msra.mxu0 %v542
    %652 = vmatpush.msra.mxu0 %v538
    %653 = vmatpush.msra.mxu0 %v534
    %654 = vmatpush.msra.mxu0 %v530
    %655 = vmatpush.msra.mxu0 %v526
    %656 = vmatmul.f32.gmra.mxu0 %v517
    %v657 = vpop.f32.mrf.mxu0
    %v658 = vadd.f32 %v592, %v657
    %659 = vmatmul.f32.gmra.mxu0 %v518
    %v660 = vpop.f32.mrf.mxu0
    %v661 = vadd.f32 %v592, %v660
    %662 = vmatmul.f32.gmra.mxu0 %v519
    %v663 = vpop.f32.mrf.mxu0
    %v664 = vadd.f32 %v592, %v663
    %665 = vmatmul.f32.gmra.mxu0 %v520
    %v666 = vpop.f32.mrf.mxu0
    %v667 = vadd.f32 %v592, %v666
    %668 = vmatmul.f32.gmra.mxu0 %v521
    %v669 = vpop.f32.mrf.mxu0
    %v670 = vadd.f32 %v592, %v669
    %671 = vmatmul.f32.gmra.mxu0 %v522
    %v672 = vpop.f32.mrf.mxu0
    %v673 = vadd.f32 %v592, %v672
    %674 = vmatmul.f32.gmra.mxu0 %v523
    %v675 = vpop.f32.mrf.mxu0
    %v676 = vadd.f32 %v592, %v675
    %677 = vmatmul.f32.gmra.mxu0 %v524
    %v678 = vpop.f32.mrf.mxu0
    %v679 = vadd.f32 %v592, %v678
    %680 = vdwg.mxu0
    %681 = vmatpush.msra.mxu0 %v587
    %682 = vmatpush.msra.mxu0 %v583
    %683 = vmatpush.msra.mxu0 %v579
    %684 = vmatpush.msra.mxu0 %v575
    %685 = vmatpush.msra.mxu0 %v571
    %686 = vmatpush.msra.mxu0 %v567
    %687 = vmatpush.msra.mxu0 %v563
    %688 = vmatpush.msra.mxu0 %v559
    %689 = vmatpush.msra.mxu0 %v555
    %690 = vmatpush.msra.mxu0 %v551
    %691 = vmatpush.msra.mxu0 %v547
    %692 = vmatpush.msra.mxu0 %v543
    %693 = vmatpush.msra.mxu0 %v539
    %694 = vmatpush.msra.mxu0 %v535
    %695 = vmatpush.msra.mxu0 %v531
    %696 = vmatpush.msra.mxu0 %v527
    %697 = vmatmul.f32.gmra.mxu0 %v517
    %v698 = vpop.f32.mrf.mxu0
    %v699 = vadd.f32 %v593, %v698
    %700 = vmatmul.f32.gmra.mxu0 %v518
    %v701 = vpop.f32.mrf.mxu0
    %v702 = vadd.f32 %v593, %v701
    %703 = vmatmul.f32.gmra.mxu0 %v519
    %v704 = vpop.f32.mrf.mxu0
    %v705 = vadd.f32 %v593, %v704
    %706 = vmatmul.f32.gmra.mxu0 %v520
    %v707 = vpop.f32.mrf.mxu0
    %v708 = vadd.f32 %v593, %v707
    %709 = vmatmul.f32.gmra.mxu0 %v521
    %v710 = vpop.f32.mrf.mxu0
    %v711 = vadd.f32 %v593, %v710
    %712 = vmatmul.f32.gmra.mxu0 %v522
    %v713 = vpop.f32.mrf.mxu0
    %v714 = vadd.f32 %v593, %v713
    %715 = vmatmul.f32.gmra.mxu0 %v523
    %v716 = vpop.f32.mrf.mxu0
    %v717 = vadd.f32 %v593, %v716
    %718 = vmatmul.f32.gmra.mxu0 %v524
    %v719 = vpop.f32.mrf.mxu0
    %v720 = vadd.f32 %v593, %v719
    %721 = vdwg.mxu0
    %722 = vmatpush.msra.mxu0 %v588
    %723 = vmatpush.msra.mxu0 %v584
    %724 = vmatpush.msra.mxu0 %v580
    %725 = vmatpush.msra.mxu0 %v576
    %726 = vmatpush.msra.mxu0 %v572
    %727 = vmatpush.msra.mxu0 %v568
    %728 = vmatpush.msra.mxu0 %v564
    %729 = vmatpush.msra.mxu0 %v560
    %730 = vmatpush.msra.mxu0 %v556
    %731 = vmatpush.msra.mxu0 %v552
    %732 = vmatpush.msra.mxu0 %v548
    %733 = vmatpush.msra.mxu0 %v544
    %734 = vmatpush.msra.mxu0 %v540
    %735 = vmatpush.msra.mxu0 %v536
    %736 = vmatpush.msra.mxu0 %v532
    %737 = vmatpush.msra.mxu0 %v528
    %738 = vmatmul.f32.gmra.mxu0 %v517
    %v739 = vpop.f32.mrf.mxu0
    %v740 = vadd.f32 %v594, %v739
    %741 = vmatmul.f32.gmra.mxu0 %v518
    %v742 = vpop.f32.mrf.mxu0
    %v743 = vadd.f32 %v594, %v742
    %744 = vmatmul.f32.gmra.mxu0 %v519
    %v745 = vpop.f32.mrf.mxu0
    %v746 = vadd.f32 %v594, %v745
    %747 = vmatmul.f32.gmra.mxu0 %v520
    %v748 = vpop.f32.mrf.mxu0
    %v749 = vadd.f32 %v594, %v748
    %750 = vmatmul.f32.gmra.mxu0 %v521
    %v751 = vpop.f32.mrf.mxu0
    %v752 = vadd.f32 %v594, %v751
    %753 = vmatmul.f32.gmra.mxu0 %v522
    %v754 = vpop.f32.mrf.mxu0
    %v755 = vadd.f32 %v594, %v754
    %756 = vmatmul.f32.gmra.mxu0 %v523
    %v757 = vpop.f32.mrf.mxu0
    %v758 = vadd.f32 %v594, %v757
    %759 = vmatmul.f32.gmra.mxu0 %v524
    %v760 = vpop.f32.mrf.mxu0
    %v761 = vadd.f32 %v594, %v760
    %762 = vdwg.mxu0
    %763 = vst [vmem:[#allocation4] sm:$0xff] %v617
    %764 = vst [vmem:[#allocation4 + $0x8] sm:$0xff] %v658
    %765 = vst [vmem:[#allocation4 + $0x10] sm:$0xff] %v699
    %766 = vst [vmem:[#allocation4 + $0x18] sm:$0xff] %v740
    %767 = vst [vmem:[#allocation4 + $0x20] sm:$0xff] %v620
    %768 = vst [vmem:[#allocation4 + $0x28] sm:$0xff] %v661
    %769 = vst [vmem:[#allocation4 + $0x30] sm:$0xff] %v702
    %770 = vst [vmem:[#allocation4 + $0x38] sm:$0xff] %v743
    %771 = vst [vmem:[#allocation4 + $0x40] sm:$0xff] %v623
    %772 = vst [vmem:[#allocation4 + $0x48] sm:$0xff] %v664
    %773 = vst [vmem:[#allocation4 + $0x50] sm:$0xff] %v705
    %774 = vst [vmem:[#allocation4 + $0x58] sm:$0xff] %v746
    %775 = vst [vmem:[#allocation4 + $0x60] sm:$0xff] %v626
    %776 = vst [vmem:[#allocation4 + $0x68] sm:$0xff] %v667
    %777 = vst [vmem:[#allocation4 + $0x70] sm:$0xff] %v708
    %778 = vst [vmem:[#allocation4 + $0x78] sm:$0xff] %v749
    %779 = vst [vmem:[#allocation4 + $0x80] sm:$0xff] %v629
    %780 = vst [vmem:[#allocation4 + $0x88] sm:$0xff] %v670
    %781 = vst [vmem:[#allocation4 + $0x90] sm:$0xff] %v711
    %782 = vst [vmem:[#allocation4 + $0x98] sm:$0xff] %v752
    %783 = vst [vmem:[#allocation4 + $0xa0] sm:$0xff] %v632
    %784 = vst [vmem:[#allocation4 + $0xa8] sm:$0xff] %v673
    %785 = vst [vmem:[#allocation4 + $0xb0] sm:$0xff] %v714
    %786 = vst [vmem:[#allocation4 + $0xb8] sm:$0xff] %v755
    %787 = vst [vmem:[#allocation4 + $0xc0] sm:$0xff] %v635
    %788 = vst [vmem:[#allocation4 + $0xc8] sm:$0xff] %v676
    %789 = vst [vmem:[#allocation4 + $0xd0] sm:$0xff] %v717
    %790 = vst [vmem:[#allocation4 + $0xd8] sm:$0xff] %v758
    %791 = vst [vmem:[#allocation4 + $0xe0] sm:$0xff] %v638
    %792 = vst [vmem:[#allocation4 + $0xe8] sm:$0xff] %v679
    %793 = vst [vmem:[#allocation4 + $0xf0] sm:$0xff] %v720
    %794 = vst [vmem:[#allocation4 + $0xf8] sm:$0xff] %v761
    %v795 = vld [vmem:[#allocation9] sm:$0xff]
    %v796 = vld [vmem:[#allocation9 + $0x8] sm:$0xff]
    %v797 = vld [vmem:[#allocation9 + $0x10] sm:$0xff]
    %v798 = vld [vmem:[#allocation9 + $0x18] sm:$0xff]
    %v799 = vld [vmem:[#allocation9 + $0x20] sm:$0xff]
    %v800 = vld [vmem:[#allocation9 + $0x28] sm:$0xff]
    %v801 = vld [vmem:[#allocation9 + $0x30] sm:$0xff]
    %v802 = vld [vmem:[#allocation9 + $0x38] sm:$0xff]
    %v803 = vld [vmem:[#allocation9 + $0x40] sm:$0xff]
    %v804 = vld [vmem:[#allocation9 + $0x48] sm:$0xff]
    %v805 = vld [vmem:[#allocation9 + $0x50] sm:$0xff]
    %v806 = vld [vmem:[#allocation9 + $0x58] sm:$0xff]
    %v807 = vld [vmem:[#allocation9 + $0x60] sm:$0xff]
    %v808 = vld [vmem:[#allocation9 + $0x68] sm:$0xff]
    %v809 = vld [vmem:[#allocation9 + $0x70] sm:$0xff]
    %v810 = vld [vmem:[#allocation9 + $0x78] sm:$0xff]
    %v811 = vld [vmem:[#allocation9 + $0x80] sm:$0xff]
    %v812 = vld [vmem:[#allocation9 + $0x88] sm:$0xff]
    %v813 = vld [vmem:[#allocation9 + $0x90] sm:$0xff]
    %v814 = vld [vmem:[#allocation9 + $0x98] sm:$0xff]
    %v815 = vld [vmem:[#allocation9 + $0xa0] sm:$0xff]
    %v816 = vld [vmem:[#allocation9 + $0xa8] sm:$0xff]
    %v817 = vld [vmem:[#allocation9 + $0xb0] sm:$0xff]
    %v818 = vld [vmem:[#allocation9 + $0xb8] sm:$0xff]
    %v819 = vld [vmem:[#allocation9 + $0xc0] sm:$0xff]
    %v820 = vld [vmem:[#allocation9 + $0xc8] sm:$0xff]
    %v821 = vld [vmem:[#allocation9 + $0xd0] sm:$0xff]
    %v822 = vld [vmem:[#allocation9 + $0xd8] sm:$0xff]
    %v823 = vld [vmem:[#allocation9 + $0xe0] sm:$0xff]
    %v824 = vld [vmem:[#allocation9 + $0xe8] sm:$0xff]
    %v825 = vld [vmem:[#allocation9 + $0xf0] sm:$0xff]
    %v826 = vld [vmem:[#allocation9 + $0xf8] sm:$0xff]
    %v827 = vld [vmem:[#allocation9 + $0x100] sm:$0xff]
    %v828 = vld [vmem:[#allocation9 + $0x108] sm:$0xff]
    %v829 = vld [vmem:[#allocation9 + $0x110] sm:$0xff]
    %v830 = vld [vmem:[#allocation9 + $0x118] sm:$0xff]
    %v831 = vld [vmem:[#allocation9 + $0x120] sm:$0xff]
    %v832 = vld [vmem:[#allocation9 + $0x128] sm:$0xff]
    %v833 = vld [vmem:[#allocation9 + $0x130] sm:$0xff]
    %v834 = vld [vmem:[#allocation9 + $0x138] sm:$0xff]
    %v835 = vld [vmem:[#allocation9 + $0x140] sm:$0xff]
    %v836 = vld [vmem:[#allocation9 + $0x148] sm:$0xff]
    %v837 = vld [vmem:[#allocation9 + $0x150] sm:$0xff]
    %v838 = vld [vmem:[#allocation9 + $0x158] sm:$0xff]
    %v839 = vld [vmem:[#allocation9 + $0x160] sm:$0xff]
    %v840 = vld [vmem:[#allocation9 + $0x168] sm:$0xff]
    %v841 = vld [vmem:[#allocation9 + $0x170] sm:$0xff]
    %v842 = vld [vmem:[#allocation9 + $0x178] sm:$0xff]
    %v843 = vld [vmem:[#allocation9 + $0x180] sm:$0xff]
    %v844 = vld [vmem:[#allocation9 + $0x188] sm:$0xff]
    %v845 = vld [vmem:[#allocation9 + $0x190] sm:$0xff]
    %v846 = vld [vmem:[#allocation9 + $0x198] sm:$0xff]
    %v847 = vld [vmem:[#allocation9 + $0x1a0] sm:$0xff]
    %v848 = vld [vmem:[#allocation9 + $0x1a8] sm:$0xff]
    %v849 = vld [vmem:[#allocation9 + $0x1b0] sm:$0xff]
    %v850 = vld [vmem:[#allocation9 + $0x1b8] sm:$0xff]
    %v851 = vld [vmem:[#allocation9 + $0x1c0] sm:$0xff]
    %v852 = vld [vmem:[#allocation9 + $0x1c8] sm:$0xff]
    %v853 = vld [vmem:[#allocation9 + $0x1d0] sm:$0xff]
    %v854 = vld [vmem:[#allocation9 + $0x1d8] sm:$0xff]
    %v855 = vld [vmem:[#allocation9 + $0x1e0] sm:$0xff]
    %v856 = vld [vmem:[#allocation9 + $0x1e8] sm:$0xff]
    %v857 = vld [vmem:[#allocation9 + $0x1f0] sm:$0xff]
    %v858 = vld [vmem:[#allocation9 + $0x1f8] sm:$0xff]
    loop: start=0, step=1, limit=8
    $region81: #{tpu_custom_call.1} parent=1 // loop_pre_header
      _
    $region82: #{tpu_custom_call.1} parent=1 // loop_header
      %s860 = sphi 0, %s864
      %p861 = scmp.ge.s32.totalorder %s860, 8
      %v865 = vphi 0.0, %v1023
      %v866 = vphi 0.0, %v1021
    $region83: #{tpu_custom_call.1} parent=1 // loop_header_branch
      %863 = sbr.rel (%p861) target = $region87
    $region84: #{tpu_custom_call.1} parent=1 // loop_body
      %s867 = smul.u32 %s860, 8
      %s868 = sshra.s32 %s867, 3
      %s869 = sand.u32 %s867, 7
      %s870 = smul.u32 %s868, 4
      %s871 = smul.addr %s870, 8
      %s872 = scalar_lea.vmem [#allocation4], %s871
      %v873 = vld [vmem:[%s872] sm:$0xff]
      %v874 = vld [vmem:[%s872 + $0x8] sm:$0xff]
      %v875 = vld [vmem:[%s872 + $0x10] sm:$0xff]
      %v876 = vld [vmem:[%s872 + $0x18] sm:$0xff]
      %877 = vmatpush.msra.mxu0 %v855
      %878 = vmatpush.msra.mxu0 %v851
      %879 = vmatpush.msra.mxu0 %v847
      %880 = vmatpush.msra.mxu0 %v843
      %881 = vmatpush.msra.mxu0 %v839
      %882 = vmatpush.msra.mxu0 %v835
      %883 = vmatpush.msra.mxu0 %v831
      %884 = vmatpush.msra.mxu0 %v827
      %885 = vmatpush.msra.mxu0 %v823
      %886 = vmatpush.msra.mxu0 %v819
      %887 = vmatpush.msra.mxu0 %v815
      %888 = vmatpush.msra.mxu0 %v811
      %889 = vmatpush.msra.mxu0 %v807
      %890 = vmatpush.msra.mxu0 %v803
      %891 = vmatpush.msra.mxu0 %v799
      %892 = vmatpush.msra.mxu0 %v795
      %893 = vmatmul.f32.gmra.mxu0 %v865
      %v894 = vpop.f32.mrf.mxu0
      %v895 = vadd.f32 0.0, %v894
      %896 = vdwg.mxu0
      %897 = vmatpush.msra.mxu0 %v856
      %898 = vmatpush.msra.mxu0 %v852
      %899 = vmatpush.msra.mxu0 %v848
      %900 = vmatpush.msra.mxu0 %v844
      %901 = vmatpush.msra.mxu0 %v840
      %902 = vmatpush.msra.mxu0 %v836
      %903 = vmatpush.msra.mxu0 %v832
      %904 = vmatpush.msra.mxu0 %v828
      %905 = vmatpush.msra.mxu0 %v824
      %906 = vmatpush.msra.mxu0 %v820
      %907 = vmatpush.msra.mxu0 %v816
      %908 = vmatpush.msra.mxu0 %v812
      %909 = vmatpush.msra.mxu0 %v808
      %910 = vmatpush.msra.mxu0 %v804
      %911 = vmatpush.msra.mxu0 %v800
      %912 = vmatpush.msra.mxu0 %v796
      %913 = vmatmul.f32.gmra.mxu0 %v865
      %v914 = vpop.f32.mrf.mxu0
      %v915 = vadd.f32 0.0, %v914
      %916 = vdwg.mxu0
      %917 = vmatpush.msra.mxu0 %v857
      %918 = vmatpush.msra.mxu0 %v853
      %919 = vmatpush.msra.mxu0 %v849
      %920 = vmatpush.msra.mxu0 %v845
      %921 = vmatpush.msra.mxu0 %v841
      %922 = vmatpush.msra.mxu0 %v837
      %923 = vmatpush.msra.mxu0 %v833
      %924 = vmatpush.msra.mxu0 %v829
      %925 = vmatpush.msra.mxu0 %v825
      %926 = vmatpush.msra.mxu0 %v821
      %927 = vmatpush.msra.mxu0 %v817
      %928 = vmatpush.msra.mxu0 %v813
      %929 = vmatpush.msra.mxu0 %v809
      %930 = vmatpush.msra.mxu0 %v805
      %931 = vmatpush.msra.mxu0 %v801
      %932 = vmatpush.msra.mxu0 %v797
      %933 = vmatmul.f32.gmra.mxu0 %v865
      %v934 = vpop.f32.mrf.mxu0
      %v935 = vadd.f32 0.0, %v934
      %936 = vdwg.mxu0
      %937 = vmatpush.msra.mxu0 %v858
      %938 = vmatpush.msra.mxu0 %v854
      %939 = vmatpush.msra.mxu0 %v850
      %940 = vmatpush.msra.mxu0 %v846
      %941 = vmatpush.msra.mxu0 %v842
      %942 = vmatpush.msra.mxu0 %v838
      %943 = vmatpush.msra.mxu0 %v834
      %944 = vmatpush.msra.mxu0 %v830
      %945 = vmatpush.msra.mxu0 %v826
      %946 = vmatpush.msra.mxu0 %v822
      %947 = vmatpush.msra.mxu0 %v818
      %948 = vmatpush.msra.mxu0 %v814
      %949 = vmatpush.msra.mxu0 %v810
      %950 = vmatpush.msra.mxu0 %v806
      %951 = vmatpush.msra.mxu0 %v802
      %952 = vmatpush.msra.mxu0 %v798
      %953 = vmatmul.f32.gmra.mxu0 %v865
      %v954 = vpop.f32.mrf.mxu0
      %v955 = vadd.f32 0.0, %v954
      %956 = vdwg.mxu0
      %v957 = vadd.f32 %v873, %v895
      %v958 = vadd.f32 %v874, %v915
      %v959 = vadd.f32 %v875, %v935
      %v960 = vadd.f32 %v876, %v955
      %v961 = vxor.u32 %v957, 2147483648
      %v962 = vmul.f32 %v961, 1.442695
      %v963 = vpow.pop %v962
      %v964 = vadd.f32 %v963, 1.0
      %v965 = vrcp.pop %v964
      %v966 = vmul.f32 %v964, %v965
      %v967 = vsub.f32 1.0, %v966
      %v968 = vmul.f32 %v965, %v967
      %v969 = vadd.f32 %v965, %v968
      %vm970 = vweird.f32 %v964
      %vm971 = vweird.f32 %v965
      %vm972 = vmor %vm970, %vm971
      %v973 = vsel %vm972, %v965, %v969
      %v974 = vand.u32 2147483647, %v964
      %vm975 = vcmp.eq.f32.partialorder %v974, 8.507059e+37
      %v976 = vand.u32 %v964, 2147483648
      %v977 = vor.u32 1.1754944e-38, %v976
      %v978 = vsel %vm975, %v977, %v973
      %v979 = vmul.f32 1.0, %v978
      %v980 = vxor.u32 %v958, 2147483648
      %v981 = vmul.f32 %v980, 1.442695
      %v982 = vpow.pop %v981
      %v983 = vadd.f32 %v982, 1.0
      %v984 = vrcp.pop %v983
      %v985 = vmul.f32 %v983, %v984
      %v986 = vsub.f32 1.0, %v985
      %v987 = vmul.f32 %v984, %v986
      %v988 = vadd.f32 %v984, %v987
      %vm989 = vweird.f32 %v983
      %vm990 = vweird.f32 %v984
      %vm991 = vmor %vm989, %vm990
      %v992 = vsel %vm991, %v984, %v988
      %v993 = vand.u32 2147483647, %v983
      %vm994 = vcmp.eq.f32.partialorder %v993, 8.507059e+37
      %v995 = vand.u32 %v983, 2147483648
      %v996 = vor.u32 1.1754944e-38, %v995
      %v997 = vsel %vm994, %v996, %v992
      %v998 = vmul.f32 1.0, %v997
      %v999 = vtanh.pop %v959
      %v1000 = vxor.u32 %v960, 2147483648
      %v1001 = vmul.f32 %v1000, 1.442695
      %v1002 = vpow.pop %v1001
      %v1003 = vadd.f32 %v1002, 1.0
      %v1004 = vrcp.pop %v1003
      %v1005 = vmul.f32 %v1003, %v1004
      %v1006 = vsub.f32 1.0, %v1005
      %v1007 = vmul.f32 %v1004, %v1006
      %v1008 = vadd.f32 %v1004, %v1007
      %vm1009 = vweird.f32 %v1003
      %vm1010 = vweird.f32 %v1004
      %vm1011 = vmor %vm1009, %vm1010
      %v1012 = vsel %vm1011, %v1004, %v1008
      %v1013 = vand.u32 2147483647, %v1003
      %vm1014 = vcmp.eq.f32.partialorder %v1013, 8.507059e+37
      %v1015 = vand.u32 %v1003, 2147483648
      %v1016 = vor.u32 1.1754944e-38, %v1015
      %v1017 = vsel %vm1014, %v1016, %v1012
      %v1018 = vmul.f32 1.0, %v1017
      %v1019 = vmul.f32 %v998, %v866
      %v1020 = vmul.f32 %v979, %v999
      %v1021 = vadd.f32 %v1019, %v1020
      %v1022 = vtanh.pop %v1021
      %v1023 = vmul.f32 %v1018, %v1022
      %s1024 = scalar_lea.vmem [#allocation3], %s867
      %1025 = vst [vmem:[%s1024] sm:$0xff] %v1023
    $region85: #{tpu_custom_call.1} parent=1 // loop_footer
      %s864 = sadd.s32 1, %s860
    $region86: #{tpu_custom_call.1} parent=1 // loop_footer_branch
      %859 = sbr.rel target = $region82
    $region87: #{tpu_custom_call.1} parent=1 // loop_exit
      _
    %v1026 = vld [vmem:[#allocation3] sm:$0xff]
    %v1027 = vld [vmem:[#allocation3 + $0x8] sm:$0xff]
    %v1028 = vld [vmem:[#allocation3 + $0x10] sm:$0xff]
    %v1029 = vld [vmem:[#allocation3 + $0x18] sm:$0xff]
    %v1030 = vld [vmem:[#allocation3 + $0x20] sm:$0xff]
    %v1031 = vld [vmem:[#allocation3 + $0x28] sm:$0xff]
    %v1032 = vld [vmem:[#allocation3 + $0x30] sm:$0xff]
    %v1033 = vld [vmem:[#allocation3 + $0x38] sm:$0xff]
    %v1034 = vld [vmem:[#allocation10] sm:$0xff]
    %v1035 = vld [vmem:[#allocation10 + $0x8] sm:$0xff]
    %v1036 = vld [vmem:[#allocation10 + $0x10] sm:$0xff]
    %v1037 = vld [vmem:[#allocation10 + $0x18] sm:$0xff]
    %v1038 = vld [vmem:[#allocation10 + $0x20] sm:$0xff]
    %v1039 = vld [vmem:[#allocation10 + $0x28] sm:$0xff]
    %v1040 = vld [vmem:[#allocation10 + $0x30] sm:$0xff]
    %v1041 = vld [vmem:[#allocation10 + $0x38] sm:$0xff]
    %v1042 = vld [vmem:[#allocation10 + $0x40] sm:$0xff]
    %v1043 = vld [vmem:[#allocation10 + $0x48] sm:$0xff]
    %v1044 = vld [vmem:[#allocation10 + $0x50] sm:$0xff]
    %v1045 = vld [vmem:[#allocation10 + $0x58] sm:$0xff]
    %v1046 = vld [vmem:[#allocation10 + $0x60] sm:$0xff]
    %v1047 = vld [vmem:[#allocation10 + $0x68] sm:$0xff]
    %v1048 = vld [vmem:[#allocation10 + $0x70] sm:$0xff]
    %v1049 = vld [vmem:[#allocation10 + $0x78] sm:$0xff]
    %v1050 = vld [vmem:[#allocation10 + $0x80] sm:$0xff]
    %v1051 = vld [vmem:[#allocation10 + $0x88] sm:$0xff]
    %v1052 = vld [vmem:[#allocation10 + $0x90] sm:$0xff]
    %v1053 = vld [vmem:[#allocation10 + $0x98] sm:$0xff]
    %v1054 = vld [vmem:[#allocation10 + $0xa0] sm:$0xff]
    %v1055 = vld [vmem:[#allocation10 + $0xa8] sm:$0xff]
    %v1056 = vld [vmem:[#allocation10 + $0xb0] sm:$0xff]
    %v1057 = vld [vmem:[#allocation10 + $0xb8] sm:$0xff]
    %v1058 = vld [vmem:[#allocation10 + $0xc0] sm:$0xff]
    %v1059 = vld [vmem:[#allocation10 + $0xc8] sm:$0xff]
    %v1060 = vld [vmem:[#allocation10 + $0xd0] sm:$0xff]
    %v1061 = vld [vmem:[#allocation10 + $0xd8] sm:$0xff]
    %v1062 = vld [vmem:[#allocation10 + $0xe0] sm:$0xff]
    %v1063 = vld [vmem:[#allocation10 + $0xe8] sm:$0xff]
    %v1064 = vld [vmem:[#allocation10 + $0xf0] sm:$0xff]
    %v1065 = vld [vmem:[#allocation10 + $0xf8] sm:$0xff]
    %v1066 = vld [vmem:[#allocation10 + $0x100] sm:$0xff]
    %v1067 = vld [vmem:[#allocation10 + $0x108] sm:$0xff]
    %v1068 = vld [vmem:[#allocation10 + $0x110] sm:$0xff]
    %v1069 = vld [vmem:[#allocation10 + $0x118] sm:$0xff]
    %v1070 = vld [vmem:[#allocation10 + $0x120] sm:$0xff]
    %v1071 = vld [vmem:[#allocation10 + $0x128] sm:$0xff]
    %v1072 = vld [vmem:[#allocation10 + $0x130] sm:$0xff]
    %v1073 = vld [vmem:[#allocation10 + $0x138] sm:$0xff]
    %v1074 = vld [vmem:[#allocation10 + $0x140] sm:$0xff]
    %v1075 = vld [vmem:[#allocation10 + $0x148] sm:$0xff]
    %v1076 = vld [vmem:[#allocation10 + $0x150] sm:$0xff]
    %v1077 = vld [vmem:[#allocation10 + $0x158] sm:$0xff]
    %v1078 = vld [vmem:[#allocation10 + $0x160] sm:$0xff]
    %v1079 = vld [vmem:[#allocation10 + $0x168] sm:$0xff]
    %v1080 = vld [vmem:[#allocation10 + $0x170] sm:$0xff]
    %v1081 = vld [vmem:[#allocation10 + $0x178] sm:$0xff]
    %v1082 = vld [vmem:[#allocation10 + $0x180] sm:$0xff]
    %v1083 = vld [vmem:[#allocation10 + $0x188] sm:$0xff]
    %v1084 = vld [vmem:[#allocation10 + $0x190] sm:$0xff]
    %v1085 = vld [vmem:[#allocation10 + $0x198] sm:$0xff]
    %v1086 = vld [vmem:[#allocation10 + $0x1a0] sm:$0xff]
    %v1087 = vld [vmem:[#allocation10 + $0x1a8] sm:$0xff]
    %v1088 = vld [vmem:[#allocation10 + $0x1b0] sm:$0xff]
    %v1089 = vld [vmem:[#allocation10 + $0x1b8] sm:$0xff]
    %v1090 = vld [vmem:[#allocation10 + $0x1c0] sm:$0xff]
    %v1091 = vld [vmem:[#allocation10 + $0x1c8] sm:$0xff]
    %v1092 = vld [vmem:[#allocation10 + $0x1d0] sm:$0xff]
    %v1093 = vld [vmem:[#allocation10 + $0x1d8] sm:$0xff]
    %v1094 = vld [vmem:[#allocation10 + $0x1e0] sm:$0xff]
    %v1095 = vld [vmem:[#allocation10 + $0x1e8] sm:$0xff]
    %v1096 = vld [vmem:[#allocation10 + $0x1f0] sm:$0xff]
    %v1097 = vld [vmem:[#allocation10 + $0x1f8] sm:$0xff]
    %v1098 = vld [vmem:[%s9] sm:$0xf]
    %v1100 = vperm.slane %v1098, 0
    %v1101 = vperm.slane %v1098, 1
    %v1102 = vperm.slane %v1098, 2
    %v1103 = vperm.slane %v1098, 3
    %1108 = vmatpush.msra.mxu0 %v1094
    %1109 = vmatpush.msra.mxu0 %v1090
    %1110 = vmatpush.msra.mxu0 %v1086
    %1111 = vmatpush.msra.mxu0 %v1082
    %1112 = vmatpush.msra.mxu0 %v1078
    %1113 = vmatpush.msra.mxu0 %v1074
    %1114 = vmatpush.msra.mxu0 %v1070
    %1115 = vmatpush.msra.mxu0 %v1066
    %1116 = vmatpush.msra.mxu0 %v1062
    %1117 = vmatpush.msra.mxu0 %v1058
    %1118 = vmatpush.msra.mxu0 %v1054
    %1119 = vmatpush.msra.mxu0 %v1050
    %1120 = vmatpush.msra.mxu0 %v1046
    %1121 = vmatpush.msra.mxu0 %v1042
    %1122 = vmatpush.msra.mxu0 %v1038
    %1123 = vmatpush.msra.mxu0 %v1034
    %1124 = vmatmul.f32.gmra.mxu0 %v1026
    %v1125 = vpop.f32.mrf.mxu0
    %v1126 = vadd.f32 %v1100, %v1125
    %1127 = vmatmul.f32.gmra.mxu0 %v1027
    %v1128 = vpop.f32.mrf.mxu0
    %v1129 = vadd.f32 %v1100, %v1128
    %1130 = vmatmul.f32.gmra.mxu0 %v1028
    %v1131 = vpop.f32.mrf.mxu0
    %v1132 = vadd.f32 %v1100, %v1131
    %1133 = vmatmul.f32.gmra.mxu0 %v1029
    %v1134 = vpop.f32.mrf.mxu0
    %v1135 = vadd.f32 %v1100, %v1134
    %1136 = vmatmul.f32.gmra.mxu0 %v1030
    %v1137 = vpop.f32.mrf.mxu0
    %v1138 = vadd.f32 %v1100, %v1137
    %1139 = vmatmul.f32.gmra.mxu0 %v1031
    %v1140 = vpop.f32.mrf.mxu0
    %v1141 = vadd.f32 %v1100, %v1140
    %1142 = vmatmul.f32.gmra.mxu0 %v1032
    %v1143 = vpop.f32.mrf.mxu0
    %v1144 = vadd.f32 %v1100, %v1143
    %1145 = vmatmul.f32.gmra.mxu0 %v1033
    %v1146 = vpop.f32.mrf.mxu0
    %v1147 = vadd.f32 %v1100, %v1146
    %1148 = vdwg.mxu0
    %1149 = vmatpush.msra.mxu0 %v1095
    %1150 = vmatpush.msra.mxu0 %v1091
    %1151 = vmatpush.msra.mxu0 %v1087
    %1152 = vmatpush.msra.mxu0 %v1083
    %1153 = vmatpush.msra.mxu0 %v1079
    %1154 = vmatpush.msra.mxu0 %v1075
    %1155 = vmatpush.msra.mxu0 %v1071
    %1156 = vmatpush.msra.mxu0 %v1067
    %1157 = vmatpush.msra.mxu0 %v1063
    %1158 = vmatpush.msra.mxu0 %v1059
    %1159 = vmatpush.msra.mxu0 %v1055
    %1160 = vmatpush.msra.mxu0 %v1051
    %1161 = vmatpush.msra.mxu0 %v1047
    %1162 = vmatpush.msra.mxu0 %v1043
    %1163 = vmatpush.msra.mxu0 %v1039
    %1164 = vmatpush.msra.mxu0 %v1035
    %1165 = vmatmul.f32.gmra.mxu0 %v1026
    %v1166 = vpop.f32.mrf.mxu0
    %v1167 = vadd.f32 %v1101, %v1166
    %1168 = vmatmul.f32.gmra.mxu0 %v1027
    %v1169 = vpop.f32.mrf.mxu0
    %v1170 = vadd.f32 %v1101, %v1169
    %1171 = vmatmul.f32.gmra.mxu0 %v1028
    %v1172 = vpop.f32.mrf.mxu0
    %v1173 = vadd.f32 %v1101, %v1172
    %1174 = vmatmul.f32.gmra.mxu0 %v1029
    %v1175 = vpop.f32.mrf.mxu0
    %v1176 = vadd.f32 %v1101, %v1175
    %1177 = vmatmul.f32.gmra.mxu0 %v1030
    %v1178 = vpop.f32.mrf.mxu0
    %v1179 = vadd.f32 %v1101, %v1178
    %1180 = vmatmul.f32.gmra.mxu0 %v1031
    %v1181 = vpop.f32.mrf.mxu0
    %v1182 = vadd.f32 %v1101, %v1181
    %1183 = vmatmul.f32.gmra.mxu0 %v1032
    %v1184 = vpop.f32.mrf.mxu0
    %v1185 = vadd.f32 %v1101, %v1184
    %1186 = vmatmul.f32.gmra.mxu0 %v1033
    %v1187 = vpop.f32.mrf.mxu0
    %v1188 = vadd.f32 %v1101, %v1187
    %1189 = vdwg.mxu0
    %1190 = vmatpush.msra.mxu0 %v1096
    %1191 = vmatpush.msra.mxu0 %v1092
    %1192 = vmatpush.msra.mxu0 %v1088
    %1193 = vmatpush.msra.mxu0 %v1084
    %1194 = vmatpush.msra.mxu0 %v1080
    %1195 = vmatpush.msra.mxu0 %v1076
    %1196 = vmatpush.msra.mxu0 %v1072
    %1197 = vmatpush.msra.mxu0 %v1068
    %1198 = vmatpush.msra.mxu0 %v1064
    %1199 = vmatpush.msra.mxu0 %v1060
    %1200 = vmatpush.msra.mxu0 %v1056
    %1201 = vmatpush.msra.mxu0 %v1052
    %1202 = vmatpush.msra.mxu0 %v1048
    %1203 = vmatpush.msra.mxu0 %v1044
    %1204 = vmatpush.msra.mxu0 %v1040
    %1205 = vmatpush.msra.mxu0 %v1036
    %1206 = vmatmul.f32.gmra.mxu0 %v1026
    %v1207 = vpop.f32.mrf.mxu0
    %v1208 = vadd.f32 %v1102, %v1207
    %1209 = vmatmul.f32.gmra.mxu0 %v1027
    %v1210 = vpop.f32.mrf.mxu0
    %v1211 = vadd.f32 %v1102, %v1210
    %1212 = vmatmul.f32.gmra.mxu0 %v1028
    %v1213 = vpop.f32.mrf.mxu0
    %v1214 = vadd.f32 %v1102, %v1213
    %1215 = vmatmul.f32.gmra.mxu0 %v1029
    %v1216 = vpop.f32.mrf.mxu0
    %v1217 = vadd.f32 %v1102, %v1216
    %1218 = vmatmul.f32.gmra.mxu0 %v1030
    %v1219 = vpop.f32.mrf.mxu0
    %v1220 = vadd.f32 %v1102, %v1219
    %1221 = vmatmul.f32.gmra.mxu0 %v1031
    %v1222 = vpop.f32.mrf.mxu0
    %v1223 = vadd.f32 %v1102, %v1222
    %1224 = vmatmul.f32.gmra.mxu0 %v1032
    %v1225 = vpop.f32.mrf.mxu0
    %v1226 = vadd.f32 %v1102, %v1225
    %1227 = vmatmul.f32.gmra.mxu0 %v1033
    %v1228 = vpop.f32.mrf.mxu0
    %v1229 = vadd.f32 %v1102, %v1228
    %1230 = vdwg.mxu0
    %1231 = vmatpush.msra.mxu0 %v1097
    %1232 = vmatpush.msra.mxu0 %v1093
    %1233 = vmatpush.msra.mxu0 %v1089
    %1234 = vmatpush.msra.mxu0 %v1085
    %1235 = vmatpush.msra.mxu0 %v1081
    %1236 = vmatpush.msra.mxu0 %v1077
    %1237 = vmatpush.msra.mxu0 %v1073
    %1238 = vmatpush.msra.mxu0 %v1069
    %1239 = vmatpush.msra.mxu0 %v1065
    %1240 = vmatpush.msra.mxu0 %v1061
    %1241 = vmatpush.msra.mxu0 %v1057
    %1242 = vmatpush.msra.mxu0 %v1053
    %1243 = vmatpush.msra.mxu0 %v1049
    %1244 = vmatpush.msra.mxu0 %v1045
    %1245 = vmatpush.msra.mxu0 %v1041
    %1246 = vmatpush.msra.mxu0 %v1037
    %1247 = vmatmul.f32.gmra.mxu0 %v1026
    %v1248 = vpop.f32.mrf.mxu0
    %v1249 = vadd.f32 %v1103, %v1248
    %1250 = vmatmul.f32.gmra.mxu0 %v1027
    %v1251 = vpop.f32.mrf.mxu0
    %v1252 = vadd.f32 %v1103, %v1251
    %1253 = vmatmul.f32.gmra.mxu0 %v1028
    %v1254 = vpop.f32.mrf.mxu0
    %v1255 = vadd.f32 %v1103, %v1254
    %1256 = vmatmul.f32.gmra.mxu0 %v1029
    %v1257 = vpop.f32.mrf.mxu0
    %v1258 = vadd.f32 %v1103, %v1257
    %1259 = vmatmul.f32.gmra.mxu0 %v1030
    %v1260 = vpop.f32.mrf.mxu0
    %v1261 = vadd.f32 %v1103, %v1260
    %1262 = vmatmul.f32.gmra.mxu0 %v1031
    %v1263 = vpop.f32.mrf.mxu0
    %v1264 = vadd.f32 %v1103, %v1263
    %1265 = vmatmul.f32.gmra.mxu0 %v1032
    %v1266 = vpop.f32.mrf.mxu0
    %v1267 = vadd.f32 %v1103, %v1266
    %1268 = vmatmul.f32.gmra.mxu0 %v1033
    %v1269 = vpop.f32.mrf.mxu0
    %v1270 = vadd.f32 %v1103, %v1269
    %1271 = vdwg.mxu0
    %1272 = vst [vmem:[#allocation4] sm:$0xff] %v1126
    %1273 = vst [vmem:[#allocation4 + $0x8] sm:$0xff] %v1167
    %1274 = vst [vmem:[#allocation4 + $0x10] sm:$0xff] %v1208
    %1275 = vst [vmem:[#allocation4 + $0x18] sm:$0xff] %v1249
    %1276 = vst [vmem:[#allocation4 + $0x20] sm:$0xff] %v1129
    %1277 = vst [vmem:[#allocation4 + $0x28] sm:$0xff] %v1170
    %1278 = vst [vmem:[#allocation4 + $0x30] sm:$0xff] %v1211
    %1279 = vst [vmem:[#allocation4 + $0x38] sm:$0xff] %v1252
    %1280 = vst [vmem:[#allocation4 + $0x40] sm:$0xff] %v1132
    %1281 = vst [vmem:[#allocation4 + $0x48] sm:$0xff] %v1173
    %1282 = vst [vmem:[#allocation4 + $0x50] sm:$0xff] %v1214
    %1283 = vst [vmem:[#allocation4 + $0x58] sm:$0xff] %v1255
    %1284 = vst [vmem:[#allocation4 + $0x60] sm:$0xff] %v1135
    %1285 = vst [vmem:[#allocation4 + $0x68] sm:$0xff] %v1176
    %1286 = vst [vmem:[#allocation4 + $0x70] sm:$0xff] %v1217
    %1287 = vst [vmem:[#allocation4 + $0x78] sm:$0xff] %v1258
    %1288 = vst [vmem:[#allocation4 + $0x80] sm:$0xff] %v1138
    %1289 = vst [vmem:[#allocation4 + $0x88] sm:$0xff] %v1179
    %1290 = vst [vmem:[#allocation4 + $0x90] sm:$0xff] %v1220
    %1291 = vst [vmem:[#allocation4 + $0x98] sm:$0xff] %v1261
    %1292 = vst [vmem:[#allocation4 + $0xa0] sm:$0xff] %v1141
    %1293 = vst [vmem:[#allocation4 + $0xa8] sm:$0xff] %v1182
    %1294 = vst [vmem:[#allocation4 + $0xb0] sm:$0xff] %v1223
    %1295 = vst [vmem:[#allocation4 + $0xb8] sm:$0xff] %v1264
    %1296 = vst [vmem:[#allocation4 + $0xc0] sm:$0xff] %v1144
    %1297 = vst [vmem:[#allocation4 + $0xc8] sm:$0xff] %v1185
    %1298 = vst [vmem:[#allocation4 + $0xd0] sm:$0xff] %v1226
    %1299 = vst [vmem:[#allocation4 + $0xd8] sm:$0xff] %v1267
    %1300 = vst [vmem:[#allocation4 + $0xe0] sm:$0xff] %v1147
    %1301 = vst [vmem:[#allocation4 + $0xe8] sm:$0xff] %v1188
    %1302 = vst [vmem:[#allocation4 + $0xf0] sm:$0xff] %v1229
    %1303 = vst [vmem:[#allocation4 + $0xf8] sm:$0xff] %v1270
    %v1304 = vld [vmem:[#allocation12] sm:$0xff]
    %v1305 = vld [vmem:[#allocation12 + $0x8] sm:$0xff]
    %v1306 = vld [vmem:[#allocation12 + $0x10] sm:$0xff]
    %v1307 = vld [vmem:[#allocation12 + $0x18] sm:$0xff]
    %v1308 = vld [vmem:[#allocation12 + $0x20] sm:$0xff]
    %v1309 = vld [vmem:[#allocation12 + $0x28] sm:$0xff]
    %v1310 = vld [vmem:[#allocation12 + $0x30] sm:$0xff]
    %v1311 = vld [vmem:[#allocation12 + $0x38] sm:$0xff]
    %v1312 = vld [vmem:[#allocation12 + $0x40] sm:$0xff]
    %v1313 = vld [vmem:[#allocation12 + $0x48] sm:$0xff]
    %v1314 = vld [vmem:[#allocation12 + $0x50] sm:$0xff]
    %v1315 = vld [vmem:[#allocation12 + $0x58] sm:$0xff]
    %v1316 = vld [vmem:[#allocation12 + $0x60] sm:$0xff]
    %v1317 = vld [vmem:[#allocation12 + $0x68] sm:$0xff]
    %v1318 = vld [vmem:[#allocation12 + $0x70] sm:$0xff]
    %v1319 = vld [vmem:[#allocation12 + $0x78] sm:$0xff]
    %v1320 = vld [vmem:[#allocation12 + $0x80] sm:$0xff]
    %v1321 = vld [vmem:[#allocation12 + $0x88] sm:$0xff]
    %v1322 = vld [vmem:[#allocation12 + $0x90] sm:$0xff]
    %v1323 = vld [vmem:[#allocation12 + $0x98] sm:$0xff]
    %v1324 = vld [vmem:[#allocation12 + $0xa0] sm:$0xff]
    %v1325 = vld [vmem:[#allocation12 + $0xa8] sm:$0xff]
    %v1326 = vld [vmem:[#allocation12 + $0xb0] sm:$0xff]
    %v1327 = vld [vmem:[#allocation12 + $0xb8] sm:$0xff]
    %v1328 = vld [vmem:[#allocation12 + $0xc0] sm:$0xff]
    %v1329 = vld [vmem:[#allocation12 + $0xc8] sm:$0xff]
    %v1330 = vld [vmem:[#allocation12 + $0xd0] sm:$0xff]
    %v1331 = vld [vmem:[#allocation12 + $0xd8] sm:$0xff]
    %v1332 = vld [vmem:[#allocation12 + $0xe0] sm:$0xff]
    %v1333 = vld [vmem:[#allocation12 + $0xe8] sm:$0xff]
    %v1334 = vld [vmem:[#allocation12 + $0xf0] sm:$0xff]
    %v1335 = vld [vmem:[#allocation12 + $0xf8] sm:$0xff]
    %v1336 = vld [vmem:[#allocation12 + $0x100] sm:$0xff]
    %v1337 = vld [vmem:[#allocation12 + $0x108] sm:$0xff]
    %v1338 = vld [vmem:[#allocation12 + $0x110] sm:$0xff]
    %v1339 = vld [vmem:[#allocation12 + $0x118] sm:$0xff]
    %v1340 = vld [vmem:[#allocation12 + $0x120] sm:$0xff]
    %v1341 = vld [vmem:[#allocation12 + $0x128] sm:$0xff]
    %v1342 = vld [vmem:[#allocation12 + $0x130] sm:$0xff]
    %v1343 = vld [vmem:[#allocation12 + $0x138] sm:$0xff]
    %v1344 = vld [vmem:[#allocation12 + $0x140] sm:$0xff]
    %v1345 = vld [vmem:[#allocation12 + $0x148] sm:$0xff]
    %v1346 = vld [vmem:[#allocation12 + $0x150] sm:$0xff]
    %v1347 = vld [vmem:[#allocation12 + $0x158] sm:$0xff]
    %v1348 = vld [vmem:[#allocation12 + $0x160] sm:$0xff]
    %v1349 = vld [vmem:[#allocation12 + $0x168] sm:$0xff]
    %v1350 = vld [vmem:[#allocation12 + $0x170] sm:$0xff]
    %v1351 = vld [vmem:[#allocation12 + $0x178] sm:$0xff]
    %v1352 = vld [vmem:[#allocation12 + $0x180] sm:$0xff]
    %v1353 = vld [vmem:[#allocation12 + $0x188] sm:$0xff]
    %v1354 = vld [vmem:[#allocation12 + $0x190] sm:$0xff]
    %v1355 = vld [vmem:[#allocation12 + $0x198] sm:$0xff]
    %v1356 = vld [vmem:[#allocation12 + $0x1a0] sm:$0xff]
    %v1357 = vld [vmem:[#allocation12 + $0x1a8] sm:$0xff]
    %v1358 = vld [vmem:[#allocation12 + $0x1b0] sm:$0xff]
    %v1359 = vld [vmem:[#allocation12 + $0x1b8] sm:$0xff]
    %v1360 = vld [vmem:[#allocation12 + $0x1c0] sm:$0xff]
    %v1361 = vld [vmem:[#allocation12 + $0x1c8] sm:$0xff]
    %v1362 = vld [vmem:[#allocation12 + $0x1d0] sm:$0xff]
    %v1363 = vld [vmem:[#allocation12 + $0x1d8] sm:$0xff]
    %v1364 = vld [vmem:[#allocation12 + $0x1e0] sm:$0xff]
    %v1365 = vld [vmem:[#allocation12 + $0x1e8] sm:$0xff]
    %v1366 = vld [vmem:[#allocation12 + $0x1f0] sm:$0xff]
    %v1367 = vld [vmem:[#allocation12 + $0x1f8] sm:$0xff]
    loop: start=0, step=1, limit=8
    $region88: #{tpu_custom_call.1} parent=1 // loop_pre_header
      _
    $region89: #{tpu_custom_call.1} parent=1 // loop_header
      %s1369 = sphi 0, %s1373
      %p1370 = scmp.ge.s32.totalorder %s1369, 8
      %v1374 = vphi 0.0, %v1532
      %v1375 = vphi 0.0, %v1530
    $region90: #{tpu_custom_call.1} parent=1 // loop_header_branch
      %1372 = sbr.rel (%p1370) target = $region94
    $region91: #{tpu_custom_call.1} parent=1 // loop_body
      %s1376 = smul.u32 %s1369, 8
      %s1377 = sshra.s32 %s1376, 3
      %s1378 = sand.u32 %s1376, 7
      %s1379 = smul.u32 %s1377, 4
      %s1380 = smul.addr %s1379, 8
      %s1381 = scalar_lea.vmem [#allocation4], %s1380
      %v1382 = vld [vmem:[%s1381] sm:$0xff]
      %v1383 = vld [vmem:[%s1381 + $0x8] sm:$0xff]
      %v1384 = vld [vmem:[%s1381 + $0x10] sm:$0xff]
      %v1385 = vld [vmem:[%s1381 + $0x18] sm:$0xff]
      %1386 = vmatpush.msra.mxu0 %v1364
      %1387 = vmatpush.msra.mxu0 %v1360
      %1388 = vmatpush.msra.mxu0 %v1356
      %1389 = vmatpush.msra.mxu0 %v1352
      %1390 = vmatpush.msra.mxu0 %v1348
      %1391 = vmatpush.msra.mxu0 %v1344
      %1392 = vmatpush.msra.mxu0 %v1340
      %1393 = vmatpush.msra.mxu0 %v1336
      %1394 = vmatpush.msra.mxu0 %v1332
      %1395 = vmatpush.msra.mxu0 %v1328
      %1396 = vmatpush.msra.mxu0 %v1324
      %1397 = vmatpush.msra.mxu0 %v1320
      %1398 = vmatpush.msra.mxu0 %v1316
      %1399 = vmatpush.msra.mxu0 %v1312
      %1400 = vmatpush.msra.mxu0 %v1308
      %1401 = vmatpush.msra.mxu0 %v1304
      %1402 = vmatmul.f32.gmra.mxu0 %v1374
      %v1403 = vpop.f32.mrf.mxu0
      %v1404 = vadd.f32 0.0, %v1403
      %1405 = vdwg.mxu0
      %1406 = vmatpush.msra.mxu0 %v1365
      %1407 = vmatpush.msra.mxu0 %v1361
      %1408 = vmatpush.msra.mxu0 %v1357
      %1409 = vmatpush.msra.mxu0 %v1353
      %1410 = vmatpush.msra.mxu0 %v1349
      %1411 = vmatpush.msra.mxu0 %v1345
      %1412 = vmatpush.msra.mxu0 %v1341
      %1413 = vmatpush.msra.mxu0 %v1337
      %1414 = vmatpush.msra.mxu0 %v1333
      %1415 = vmatpush.msra.mxu0 %v1329
      %1416 = vmatpush.msra.mxu0 %v1325
      %1417 = vmatpush.msra.mxu0 %v1321
      %1418 = vmatpush.msra.mxu0 %v1317
      %1419 = vmatpush.msra.mxu0 %v1313
      %1420 = vmatpush.msra.mxu0 %v1309
      %1421 = vmatpush.msra.mxu0 %v1305
      %1422 = vmatmul.f32.gmra.mxu0 %v1374
      %v1423 = vpop.f32.mrf.mxu0
      %v1424 = vadd.f32 0.0, %v1423
      %1425 = vdwg.mxu0
      %1426 = vmatpush.msra.mxu0 %v1366
      %1427 = vmatpush.msra.mxu0 %v1362
      %1428 = vmatpush.msra.mxu0 %v1358
      %1429 = vmatpush.msra.mxu0 %v1354
      %1430 = vmatpush.msra.mxu0 %v1350
      %1431 = vmatpush.msra.mxu0 %v1346
      %1432 = vmatpush.msra.mxu0 %v1342
      %1433 = vmatpush.msra.mxu0 %v1338
      %1434 = vmatpush.msra.mxu0 %v1334
      %1435 = vmatpush.msra.mxu0 %v1330
      %1436 = vmatpush.msra.mxu0 %v1326
      %1437 = vmatpush.msra.mxu0 %v1322
      %1438 = vmatpush.msra.mxu0 %v1318
      %1439 = vmatpush.msra.mxu0 %v1314
      %1440 = vmatpush.msra.mxu0 %v1310
      %1441 = vmatpush.msra.mxu0 %v1306
      %1442 = vmatmul.f32.gmra.mxu0 %v1374
      %v1443 = vpop.f32.mrf.mxu0
      %v1444 = vadd.f32 0.0, %v1443
      %1445 = vdwg.mxu0
      %1446 = vmatpush.msra.mxu0 %v1367
      %1447 = vmatpush.msra.mxu0 %v1363
      %1448 = vmatpush.msra.mxu0 %v1359
      %1449 = vmatpush.msra.mxu0 %v1355
      %1450 = vmatpush.msra.mxu0 %v1351
      %1451 = vmatpush.msra.mxu0 %v1347
      %1452 = vmatpush.msra.mxu0 %v1343
      %1453 = vmatpush.msra.mxu0 %v1339
      %1454 = vmatpush.msra.mxu0 %v1335
      %1455 = vmatpush.msra.mxu0 %v1331
      %1456 = vmatpush.msra.mxu0 %v1327
      %1457 = vmatpush.msra.mxu0 %v1323
      %1458 = vmatpush.msra.mxu0 %v1319
      %1459 = vmatpush.msra.mxu0 %v1315
      %1460 = vmatpush.msra.mxu0 %v1311
      %1461 = vmatpush.msra.mxu0 %v1307
      %1462 = vmatmul.f32.gmra.mxu0 %v1374
      %v1463 = vpop.f32.mrf.mxu0
      %v1464 = vadd.f32 0.0, %v1463
      %1465 = vdwg.mxu0
      %v1466 = vadd.f32 %v1382, %v1404
      %v1467 = vadd.f32 %v1383, %v1424
      %v1468 = vadd.f32 %v1384, %v1444
      %v1469 = vadd.f32 %v1385, %v1464
      %v1470 = vxor.u32 %v1466, 2147483648
      %v1471 = vmul.f32 %v1470, 1.442695
      %v1472 = vpow.pop %v1471
      %v1473 = vadd.f32 %v1472, 1.0
      %v1474 = vrcp.pop %v1473
      %v1475 = vmul.f32 %v1473, %v1474
      %v1476 = vsub.f32 1.0, %v1475
      %v1477 = vmul.f32 %v1474, %v1476
      %v1478 = vadd.f32 %v1474, %v1477
      %vm1479 = vweird.f32 %v1473
      %vm1480 = vweird.f32 %v1474
      %vm1481 = vmor %vm1479, %vm1480
      %v1482 = vsel %vm1481, %v1474, %v1478
      %v1483 = vand.u32 2147483647, %v1473
      %vm1484 = vcmp.eq.f32.partialorder %v1483, 8.507059e+37
      %v1485 = vand.u32 %v1473, 2147483648
      %v1486 = vor.u32 1.1754944e-38, %v1485
      %v1487 = vsel %vm1484, %v1486, %v1482
      %v1488 = vmul.f32 1.0, %v1487
      %v1489 = vxor.u32 %v1467, 2147483648
      %v1490 = vmul.f32 %v1489, 1.442695
      %v1491 = vpow.pop %v1490
      %v1492 = vadd.f32 %v1491, 1.0
      %v1493 = vrcp.pop %v1492
      %v1494 = vmul.f32 %v1492, %v1493
      %v1495 = vsub.f32 1.0, %v1494
      %v1496 = vmul.f32 %v1493, %v1495
      %v1497 = vadd.f32 %v1493, %v1496
      %vm1498 = vweird.f32 %v1492
      %vm1499 = vweird.f32 %v1493
      %vm1500 = vmor %vm1498, %vm1499
      %v1501 = vsel %vm1500, %v1493, %v1497
      %v1502 = vand.u32 2147483647, %v1492
      %vm1503 = vcmp.eq.f32.partialorder %v1502, 8.507059e+37
      %v1504 = vand.u32 %v1492, 2147483648
      %v1505 = vor.u32 1.1754944e-38, %v1504
      %v1506 = vsel %vm1503, %v1505, %v1501
      %v1507 = vmul.f32 1.0, %v1506
      %v1508 = vtanh.pop %v1468
      %v1509 = vxor.u32 %v1469, 2147483648
      %v1510 = vmul.f32 %v1509, 1.442695
      %v1511 = vpow.pop %v1510
      %v1512 = vadd.f32 %v1511, 1.0
      %v1513 = vrcp.pop %v1512
      %v1514 = vmul.f32 %v1512, %v1513
      %v1515 = vsub.f32 1.0, %v1514
      %v1516 = vmul.f32 %v1513, %v1515
      %v1517 = vadd.f32 %v1513, %v1516
      %vm1518 = vweird.f32 %v1512
      %vm1519 = vweird.f32 %v1513
      %vm1520 = vmor %vm1518, %vm1519
      %v1521 = vsel %vm1520, %v1513, %v1517
      %v1522 = vand.u32 2147483647, %v1512
      %vm1523 = vcmp.eq.f32.partialorder %v1522, 8.507059e+37
      %v1524 = vand.u32 %v1512, 2147483648
      %v1525 = vor.u32 1.1754944e-38, %v1524
      %v1526 = vsel %vm1523, %v1525, %v1521
      %v1527 = vmul.f32 1.0, %v1526
      %v1528 = vmul.f32 %v1507, %v1375
      %v1529 = vmul.f32 %v1488, %v1508
      %v1530 = vadd.f32 %v1528, %v1529
      %v1531 = vtanh.pop %v1530
      %v1532 = vmul.f32 %v1527, %v1531
      %s1533 = scalar_lea.vmem [#allocation2], %s1376
      %1534 = vst [vmem:[%s1533] sm:$0xff] %v1532
    $region92: #{tpu_custom_call.1} parent=1 // loop_footer
      %s1373 = sadd.s32 1, %s1369
    $region93: #{tpu_custom_call.1} parent=1 // loop_footer_branch
      %1368 = sbr.rel target = $region89
    $region94: #{tpu_custom_call.1} parent=1 // loop_exit
      _
    %v1535 = vld [vmem:[#allocation2] sm:$0xff]
    %v1536 = vld [vmem:[#allocation2 + $0x8] sm:$0xff]
    %v1537 = vld [vmem:[#allocation2 + $0x10] sm:$0xff]
    %v1538 = vld [vmem:[#allocation2 + $0x18] sm:$0xff]
    %v1539 = vld [vmem:[#allocation2 + $0x20] sm:$0xff]
    %v1540 = vld [vmem:[#allocation2 + $0x28] sm:$0xff]
    %v1541 = vld [vmem:[#allocation2 + $0x30] sm:$0xff]
    %v1542 = vld [vmem:[#allocation2 + $0x38] sm:$0xff]
    %v1543 = vld [vmem:[%s10] sm:$0xff]
    %v1544 = vld [vmem:[%s10 + $0x8] sm:$0xff]
    %v1545 = vld [vmem:[%s10 + $0x10] sm:$0xff]
    %v1546 = vld [vmem:[%s10 + $0x18] sm:$0xff]
    %v1547 = vld [vmem:[%s10 + $0x20] sm:$0xff]
    %v1548 = vld [vmem:[%s10 + $0x28] sm:$0xff]
    %v1549 = vld [vmem:[%s10 + $0x30] sm:$0xff]
    %v1550 = vld [vmem:[%s10 + $0x38] sm:$0xff]
    %v1551 = vld [vmem:[%s10 + $0x40] sm:$0xff]
    %v1552 = vld [vmem:[%s10 + $0x48] sm:$0xff]
    %v1553 = vld [vmem:[%s10 + $0x50] sm:$0xff]
    %v1554 = vld [vmem:[%s10 + $0x58] sm:$0xff]
    %v1555 = vld [vmem:[%s10 + $0x60] sm:$0xff]
    %v1556 = vld [vmem:[%s10 + $0x68] sm:$0xff]
    %v1557 = vld [vmem:[%s10 + $0x70] sm:$0xff]
    %v1558 = vld [vmem:[%s10 + $0x78] sm:$0xff]
    %v1559 = vld [vmem:[%s12] sm:$0x1]
    %v1561 = vperm.slane %v1559, 0
    %1563 = vmatpush.msra.mxu0 %v1558
    %1564 = vmatpush.msra.mxu0 %v1557
    %1565 = vmatpush.msra.mxu0 %v1556
    %1566 = vmatpush.msra.mxu0 %v1555
    %1567 = vmatpush.msra.mxu0 %v1554
    %1568 = vmatpush.msra.mxu0 %v1553
    %1569 = vmatpush.msra.mxu0 %v1552
    %1570 = vmatpush.msra.mxu0 %v1551
    %1571 = vmatpush.msra.mxu0 %v1550
    %1572 = vmatpush.msra.mxu0 %v1549
    %1573 = vmatpush.msra.mxu0 %v1548
    %1574 = vmatpush.msra.mxu0 %v1547
    %1575 = vmatpush.msra.mxu0 %v1546
    %1576 = vmatpush.msra.mxu0 %v1545
    %1577 = vmatpush.msra.mxu0 %v1544
    %1578 = vmatpush.msra.mxu0 %v1543
    %1579 = vmatmul.f32.gmra.mxu0 %v1535
    %v1580 = vpop.f32.mrf.mxu0
    %v1581 = vadd.f32 %v1561, %v1580
    %1582 = vmatmul.f32.gmra.mxu0 %v1536
    %v1583 = vpop.f32.mrf.mxu0
    %v1584 = vadd.f32 %v1561, %v1583
    %1585 = vmatmul.f32.gmra.mxu0 %v1537
    %v1586 = vpop.f32.mrf.mxu0
    %v1587 = vadd.f32 %v1561, %v1586
    %1588 = vmatmul.f32.gmra.mxu0 %v1538
    %v1589 = vpop.f32.mrf.mxu0
    %v1590 = vadd.f32 %v1561, %v1589
    %1591 = vmatmul.f32.gmra.mxu0 %v1539
    %v1592 = vpop.f32.mrf.mxu0
    %v1593 = vadd.f32 %v1561, %v1592
    %1594 = vmatmul.f32.gmra.mxu0 %v1540
    %v1595 = vpop.f32.mrf.mxu0
    %v1596 = vadd.f32 %v1561, %v1595
    %1597 = vmatmul.f32.gmra.mxu0 %v1541
    %v1598 = vpop.f32.mrf.mxu0
    %v1599 = vadd.f32 %v1561, %v1598
    %1600 = vmatmul.f32.gmra.mxu0 %v1542
    %v1601 = vpop.f32.mrf.mxu0
    %v1602 = vadd.f32 %v1561, %v1601
    %1603 = vdwg.mxu0
    %vm1604 = vcmask 31744
    %1605 = vst.msk [vmem:[#allocation4] sm:$0xff] %vm1604, %v1581
    %1606 = vst.msk [vmem:[#allocation4 + $0x20] sm:$0xff] %vm1604, %v1584
    %1607 = vst.msk [vmem:[#allocation4 + $0x40] sm:$0xff] %vm1604, %v1587
    %1608 = vst.msk [vmem:[#allocation4 + $0x60] sm:$0xff] %vm1604, %v1590
    %1609 = vst.msk [vmem:[#allocation4 + $0x80] sm:$0xff] %vm1604, %v1593
    %1610 = vst.msk [vmem:[#allocation4 + $0xa0] sm:$0xff] %vm1604, %v1596
    %1611 = vst.msk [vmem:[#allocation4 + $0xc0] sm:$0xff] %vm1604, %v1599
    %1612 = vst.msk [vmem:[#allocation4 + $0xe0] sm:$0xff] %vm1604, %v1602
    %v1613 = vld [vmem:[%s11] sm:$0x1]
    loop: start=0, step=1, limit=8
    $region95: #{tpu_custom_call.1} parent=1 // loop_pre_header
      _
    $region96: #{tpu_custom_call.1} parent=1 // loop_header
      %s1615 = sphi 0, %s1619
      %p1616 = scmp.ge.s32.totalorder %s1615, 8
      %v1620 = vphi 0.0, %v1675
      %v1621 = vphi 0.0, %v1669
    $region97: #{tpu_custom_call.1} parent=1 // loop_header_branch
      %1618 = sbr.rel (%p1616) target = $region101
    $region98: #{tpu_custom_call.1} parent=1 // loop_body
      %s1622 = smul.u32 %s1615, 8
      %s1623 = sshra.s32 %s1622, 3
      %s1624 = sand.u32 %s1622, 7
      %s1625 = smul.u32 %s1623, 4
      %s1626 = smul.addr %s1625, 8
      %s1627 = scalar_lea.vmem [#allocation4], %s1626
      %v1628 = vld [vmem:[%s1627] sm:$0xff]
      %1630 = vset.pattern.permute.xlu0 3
      %1631 = vperm.xlu0 %1630, %v1620
      %v1632 = vpop.permute.xlu0 %1631
      %v1635 = vperm.slane %v1613, 0
      %v1637 = vmul.f32 %v1632, %v1635
      %v1638 = vadd.f32 %v1628, %v1637
      %v1639 = vxor.u32 %v1638, 2147483648
      %v1640 = vmul.f32 %v1639, 1.442695
      %v1641 = vpow.pop %v1640
      %v1642 = vadd.f32 %v1641, 1.0
      %v1643 = vrcp.pop %v1642
      %v1644 = vmul.f32 %v1642, %v1643
      %v1645 = vsub.f32 1.0, %v1644
      %v1646 = vmul.f32 %v1643, %v1645
      %v1647 = vadd.f32 %v1643, %v1646
      %vm1648 = vweird.f32 %v1642
      %vm1649 = vweird.f32 %v1643
      %vm1650 = vmor %vm1648, %vm1649
      %v1651 = vsel %vm1650, %v1643, %v1647
      %v1652 = vand.u32 2147483647, %v1642
      %vm1653 = vcmp.eq.f32.partialorder %v1652, 8.507059e+37
      %v1654 = vand.u32 %v1642, 2147483648
      %v1655 = vor.u32 1.1754944e-38, %v1654
      %v1656 = vsel %vm1653, %v1655, %v1651
      %v1657 = vmul.f32 1.0, %v1656
      %v1658 = vtanh.pop %v1638
      %v1659 = vmul.f32 %v1657, %v1621
      %1661 = vrot.lane.b32.xlu0 %v1658, 126
      %v1662 = vpop.permute.xlu0 %1661
      %v1664 = vmul.f32 %v1657, %v1662
      %1666 = vrot.lane.b32.xlu0 %v1664, 1
      %v1667 = vpop.permute.xlu0 %1666
      %v1669 = vadd.f32 %v1659, %v1667
      %v1670 = vtanh.pop %v1669
      %1672 = vrot.lane.b32.xlu0 %v1670, 2
      %v1673 = vpop.permute.xlu0 %1672
      %v1675 = vmul.f32 %v1657, %v1673
      %1677 = vrot.lane.b32.xlu0 %v1675, 125
      %v1678 = vpop.permute.xlu0 %1677
      %s1680 = scalar_lea.vmem %s13, %s1622
      %vm1681 = vcmask 7168
      %1682 = vst.msk [vmem:[%s1680] sm:$0xff] %vm1681, %v1678
    $region99: #{tpu_custom_call.1} parent=1 // loop_footer
      %s1619 = sadd.s32 1, %s1615
    $region100: #{tpu_custom_call.1} parent=1 // loop_footer_branch
      %1614 = sbr.rel target = $region96
    $region101: #{tpu_custom_call.1} parent=1 // loop_exit
      _
    // Predicated region
    $region102: #{tpu_custom_call.1} parent=1 // pred_check
      _
    $region103: #{tpu_custom_call.1} parent=1 // pred_check_branch
      %1684 = sbr.rel (0) target = $region105
    $region104: #{tpu_custom_call.1} parent=1 // pred_region
      _
    $region105: #{tpu_custom_call.1} parent=1 // pred_fallthru
      _
    // Predicated region
    $region106: #{tpu_custom_call.1} parent=1 // pred_check
      _
    $region107: #{tpu_custom_call.1} parent=1 // pred_check_branch
      %1686 = sbr.rel (0) target = $region109
    $region108: #{tpu_custom_call.1} parent=1 // pred_region
      _
    $region109: #{tpu_custom_call.1} parent=1 // pred_fallthru
      _
    %1687 = vsyncpa [#allocation6], 1
    %1688 = vsyncpa [#allocation8], 1
    %1689 = vsyncpa [#allocation11], 1

</llo_original>
